<compile_context>
chip_gen: v7x
topology: tpu7x:2x2x1
jax: 0.10.0
libtpu: 0.0.40
codegen_flags: <defaults>
</compile_context>

<pallas_src>
import functools

import numpy as np

import jax
import jax.numpy as jnp
from jax.experimental import pallas as pl
from jax.experimental.pallas import tpu as pltpu

BN_EPS = 1e-5
LANE = 128


def _round_up(x, m):
    return (x + m - 1) // m * m


def _bn_relu(z, gamma, beta):
    """Training-mode BatchNorm1d folded into a per-column scale/shift + ReLU.

    a = gamma * rsqrt(var + eps), c = beta - mean * a, out = max(z*a + c, 0).
    Single-pass (sum / sum-of-squares) statistics; var floored at 0 to guard
    rsqrt against f32 cancellation.
    """
    mean = jnp.mean(z, axis=0, keepdims=True)
    var = jnp.maximum(jnp.mean(z * z, axis=0, keepdims=True) - mean * mean, 0.0)
    a = gamma * jax.lax.rsqrt(var + BN_EPS)
    c = beta - mean * a
    return jnp.maximum(z * a + c, 0.0)


def _graph_cnn_kernel(*refs, use_learn_epsilon):
    if use_learn_epsilon:
        (eps_ref, x_ref, adj_ref, gp_ref, w1_ref, w2_ref, vec_ref,
         h_ref, pooled_ref) = refs
    else:
        (x_ref, adj_ref, gp_ref, w1_ref, w2_ref, vec_ref,
         h_ref, pooled_ref) = refs
        eps_ref = None

    layer = pl.program_id(0)
    n_layers = pl.num_programs(0)

    # h lives in the h_nodes output block: its index_map is constant, so the
    # block is VMEM-resident across the whole layer grid (accumulator pattern).
    @pl.when(layer == 0)
    def _():
        h_ref[...] = x_ref[...]

    h = h_ref[...]                                    # (N, F) f32, VMEM-resident

    # Neighborhood aggregation on the MXU: bf16 inputs, f32 accumulation.
    agg = jnp.dot(adj_ref[...], h.astype(jnp.bfloat16),
                  preferred_element_type=jnp.float32)
    if use_learn_epsilon:
        agg = agg + (1.0 + eps_ref[layer]) * h        # eps from SMEM, no retrace

    w1 = w1_ref[0]                                    # (F, F) bf16
    w2 = w2_ref[0]                                    # (F, F) bf16
    vecs = vec_ref[0]                                 # (4, F) f32
    g1, be1, g2, be2 = vecs[0:1], vecs[1:2], vecs[2:3], vecs[3:4]

    # MLP (num_of_mlp_layers = 2): Linear -> BN -> ReLU -> Linear.  Linear
    # biases are omitted: a per-column constant feeding training-mode BN is
    # removed exactly by the mean subtraction.
    z = jnp.dot(agg.astype(jnp.bfloat16), w1, preferred_element_type=jnp.float32)
    z = _bn_relu(z, g1, be1)
    z = jnp.dot(z.astype(jnp.bfloat16), w2, preferred_element_type=jnp.float32)
    # Outer BatchNorm1d + ReLU (GraphCNN.next_layer).
    h_new = _bn_relu(z, g2, be2)

    h_ref[...] = h_new                                # the only (N, f) store/layer

    @pl.when(layer == n_layers - 1)
    def _():
        # TODO(synk): torch casts h to float64 for the sparse pooling matmul;
        # TPU Pallas has no f64, so the pooling runs in dense float32.
        pooled_ref[...] = jnp.dot(gp_ref[...], h_new,
                                  preferred_element_type=jnp.float32)


def graph_cnn_forward(x, adj_matrix, graph_pool, layer_params,
                      use_learn_epsilon=False, eps=None):
    n, input_dim = x.shape
    b, _ = graph_pool.shape
    hidden_dim = layer_params[0]["w1"].shape[1]
    num_layers = len(layer_params)
    f = max(_round_up(input_dim, LANE), _round_up(hidden_dim, LANE))

    def pad2(a, rows, cols):
        return jnp.pad(a, ((0, rows - a.shape[0]), (0, cols - a.shape[1])))

    x_pad = pad2(x, n, f).astype(jnp.float32)
    adj_bf16 = adj_matrix.astype(jnp.bfloat16)   # small-integer valued -> exact
    gp = graph_pool.astype(jnp.float32)

    w1_stack = jnp.stack([pad2(p["w1"], f, f) for p in layer_params]
                         ).astype(jnp.bfloat16)
    w2_stack = jnp.stack([pad2(p["w2"], f, f) for p in layer_params]
                         ).astype(jnp.bfloat16)
    # Only BN gammas/betas are needed in-kernel (linear biases cancel under
    # training-mode BN); 4 rows packed per layer -> one small streamed DMA.
    vec_stack = jnp.stack([
        pad2(jnp.concatenate([p["g1"], p["be1"], p["g2"], p["be2"]], axis=0), 4, f)
        for p in layer_params]).astype(jnp.float32)

    # Exact per-buffer VMEM accounting: 1 buffer for never-re-fetched constant
    # blocks, 2 for the layer-streamed weight stacks and the outputs.
    buf_bytes = (n * f * 4                # x (single-buffered)
                 + n * n * 2              # adj bf16 (single-buffered)
                 + b * n * 4              # graph_pool (single-buffered)
                 + 2 * (f * f * 2) * 2    # w1 + w2 tiles, double-buffered
                 + (4 * f * 4) * 2        # packed BN vectors, double-buffered
                 + n * f * 4 * 2          # h_nodes output
                 + b * f * 4 * 2)         # pooled output
    try:
        vmem_cap = int(getattr(pltpu.get_tpu_info(), "vmem_capacity_bytes",
                               64 * 1024 * 1024))
    except Exception:
        vmem_cap = 64 * 1024 * 1024       # conservative v7x-sized fallback
    # Leave 25% of physical VMEM for the compiler; 2x covers the
    # default-buffering fallback path plus internal scratch.
    vmem_limit = int(min(vmem_cap * 3 // 4,
                         max(16 * 1024 * 1024, 2 * buf_bytes + 4 * 1024 * 1024)))

    flops = num_layers * (2 * n * n * f + 2 * 2 * n * f * f) + 2 * b * n * f
    bytes_accessed = (x_pad.size * 4 + adj_bf16.size * 2 + gp.size * 4 +
                      w1_stack.size * 2 + w2_stack.size * 2 +
                      vec_stack.size * 4 + n * f * 4 + b * f * 4)

    kernel = functools.partial(_graph_cnn_kernel,
                               use_learn_epsilon=use_learn_epsilon)

    def make_call(single_buffer_constants):
        def const_spec(shape):
            if single_buffer_constants:
                return pl.BlockSpec(shape, lambda l: (0,) * len(shape),
                                    pipeline_mode=pl.Buffered(1))
            return pl.BlockSpec(shape, lambda l: (0,) * len(shape))

        in_specs = []
        if use_learn_epsilon:
            in_specs.append(pl.BlockSpec(memory_space=pltpu.MemorySpace.SMEM))
        in_specs += [
            const_spec((n, f)),                             # x (padded), read once
            const_spec((n, n)),                             # adj, constant block
            const_spec((b, n)),                             # graph_pool, read once
            pl.BlockSpec((1, f, f), lambda l: (l, 0, 0)),   # w1 stack (streamed)
            pl.BlockSpec((1, f, f), lambda l: (l, 0, 0)),   # w2 stack (streamed)
            pl.BlockSpec((1, 4, f), lambda l: (l, 0, 0)),   # packed BN vectors
        ]
        return pl.pallas_call(
            kernel,
            out_shape=[jax.ShapeDtypeStruct((n, f), jnp.float32),
                       jax.ShapeDtypeStruct((b, f), jnp.float32)],
            grid_spec=pltpu.PrefetchScalarGridSpec(
                num_scalar_prefetch=0,
                grid=(num_layers,),
                in_specs=in_specs,
                # Constant index_map => both outputs stay VMEM-resident across
                # layers; h_nodes doubles as the carried h buffer (no scratch).
                out_specs=[pl.BlockSpec((n, f), lambda l: (0, 0)),
                           pl.BlockSpec((b, f), lambda l: (0, 0))],
            ),
            compiler_params=pltpu.CompilerParams(
                dimension_semantics=("arbitrary",),   # layers are sequential
                vmem_limit_bytes=vmem_limit),
            cost_estimate=pl.CostEstimate(flops=int(flops),
                                          transcendentals=int(num_layers * 2 * f),
                                          bytes_accessed=int(bytes_accessed)),
        )

    args = []
    if use_learn_epsilon:
        if eps is None:
            eps = jnp.zeros((num_layers,), jnp.float32)
        args.append(eps)
    args += [x_pad, adj_bf16, gp, w1_stack, w2_stack, vec_stack]

    try:
        h_nodes_pad, pooled_pad = make_call(True)(*args)
    except Exception:
        # pipeline_mode=Buffered(1) hint not supported by this jax version:
        # fall back to default double-buffering (correctness unchanged).
        h_nodes_pad, pooled_pad = make_call(False)(*args)

    return pooled_pad[:, :hidden_dim], h_nodes_pad[:, :hidden_dim]


def init_params(key, num_of_layers, num_of_mlp_layers, input_dim, hidden_dim):
    """Deterministic synthetic parameters. MLP has 2 linear layers (+1 internal BN)."""
    assert num_of_mlp_layers == 2, "this script instantiates 2-layer MLPs"
    layers = []
    for layer in range(num_of_layers - 1):
        din = input_dim if layer == 0 else hidden_dim
        key, k1, k2 = jax.random.split(key, 3)
        layers.append({
            "w1": 0.1 * jax.random.normal(k1, (din, hidden_dim), jnp.float32),
            "b1": jnp.zeros((1, hidden_dim), jnp.float32),
            "g1": jnp.ones((1, hidden_dim), jnp.float32),
            "be1": jnp.zeros((1, hidden_dim), jnp.float32),
            "w2": 0.1 * jax.random.normal(k2, (hidden_dim, hidden_dim), jnp.float32),
            "b2": jnp.zeros((1, hidden_dim), jnp.float32),
            "g2": jnp.ones((1, hidden_dim), jnp.float32),   # outer BatchNorm1d
            "be2": jnp.zeros((1, hidden_dim), jnp.float32),
        })
    return layers


def _reference_batchnorm(z, gamma, beta):
    mean = jnp.mean(z, axis=0, keepdims=True)
    var = jnp.mean((z - mean) ** 2, axis=0, keepdims=True)
    return (z - mean) * jax.lax.rsqrt(var + BN_EPS) * gamma + beta


def _reference_forward(x, adj, gp, layer_params):
    # Pure-jnp float32 reference of the PyTorch forward (training-mode BN),
    # including the linear biases (they cancel exactly under BN).
    h = x
    for p in layer_params:
        pooled = adj @ h
        z = pooled @ p["w1"] + p["b1"]
        z = jnp.maximum(_reference_batchnorm(z, p["g1"], p["be1"]), 0.0)
        z = z @ p["w2"] + p["b2"]
        h = jnp.maximum(_reference_batchnorm(z, p["g2"], p["be2"]), 0.0)
    return gp @ h, h


if __name__ == "__main__":
    # Small, GraphCNN-consistent shapes.
    num_of_layers = 3        # -> 2 GIN layers
    num_of_mlp_layers = 2
    num_nodes = 16
    input_dim = 8
    hidden_dim = 32
    num_graphs = 2

    key = jax.random.PRNGKey(0)
    kx, kadj, kparam = jax.random.split(key, 3)

    x = jax.random.normal(kx, (num_nodes, input_dim), jnp.float32)

    # Random symmetric-ish adjacency with self-loops.
    adj = (jax.random.uniform(kadj, (num_nodes, num_nodes)) > 0.7).astype(jnp.float32)
    adj = jnp.maximum(adj, adj.T) + jnp.eye(num_nodes, dtype=jnp.float32)

    # Dense version of the (sparse) average graph-pooling matrix.
    gp = jnp.zeros((num_graphs, num_nodes), jnp.float32)
    gp = gp.at[0, :num_nodes // 2].set(1.0 / (num_nodes // 2))
    gp = gp.at[1, num_nodes // 2:].set(1.0 / (num_nodes // 2))

    layer_params = init_params(kparam, num_of_layers, num_of_mlp_layers,
                               input_dim, hidden_dim)

    # use_learn_epsilon=False (the reference __init__ never defines self.eps).
    pooled_h, h_nodes = graph_cnn_forward(x, adj, gp, layer_params,
                                          use_learn_epsilon=False)
    jax.block_until_ready((pooled_h, h_nodes))

    assert pooled_h.shape == (num_graphs, hidden_dim)
    assert h_nodes.shape == (num_nodes, hidden_dim)

    # Tolerance check vs float32 reference (bf16 MXU inputs -> loose tolerance).
    ref_pooled, ref_nodes = _reference_forward(x, adj, gp, layer_params)
    np.testing.assert_allclose(np.asarray(h_nodes), np.asarray(ref_nodes),
                               rtol=7.5e-2, atol=7.5e-2)
    np.testing.assert_allclose(np.asarray(pooled_h), np.asarray(ref_pooled),
                               rtol=7.5e-2, atol=7.5e-2)
    print("KERNEL_OK")
</pallas_src>

<mosaic_0001>
module attributes {stable_mosaic.version = 11 : i64} {
  func.func @_graph_cnn_kernel(%arg0: i32, %arg1: memref<16x128xf32, #tpu.memory_space<vmem>>, %arg2: memref<16x16xbf16, #tpu.memory_space<vmem>>, %arg3: memref<2x16xf32, #tpu.memory_space<vmem>>, %arg4: memref<1x128x128xbf16, #tpu.memory_space<vmem>>, %arg5: memref<1x128x128xbf16, #tpu.memory_space<vmem>>, %arg6: memref<1x4x128xf32, #tpu.memory_space<vmem>>, %arg7: memref<16x128xf32, #tpu.memory_space<vmem>>, %arg8: memref<2x128xf32, #tpu.memory_space<vmem>>) attributes {dimension_semantics = [#tpu.dimension_semantics<arbitrary>], iteration_bounds = array<i64: 2>, scalar_prefetch = 0 : i64, scratch_operands = 0 : i64, tpu.core_type = #tpu.core_type<tc>, window_params = [{pipeline_mode = #tpu.pipeline_mode<synchronous>, transform_indices = @transform_0, window_bounds = array<i64: 16, 128>}, {pipeline_mode = #tpu.pipeline_mode<synchronous>, transform_indices = @transform_1, window_bounds = array<i64: 16, 16>}, {pipeline_mode = #tpu.pipeline_mode<synchronous>, transform_indices = @transform_2, window_bounds = array<i64: 2, 16>}, {transform_indices = @transform_3, window_bounds = array<i64: 1, 128, 128>}, {transform_indices = @transform_4, window_bounds = array<i64: 1, 128, 128>}, {transform_indices = @transform_5, window_bounds = array<i64: 1, 4, 128>}, {pipeline_mode = #tpu.pipeline_mode<synchronous>, transform_indices = @transform_6, window_bounds = array<i64: 16, 128>}, {pipeline_mode = #tpu.pipeline_mode<synchronous>, transform_indices = @transform_7, window_bounds = array<i64: 2, 128>}]} {
    %c0_i32 = arith.constant 0 : i32
    %0 = arith.cmpi eq, %arg0, %c0_i32 : i32
    %1 = arith.extui %0 : i1 to i32
    %c0_i32_0 = arith.constant 0 : i32
    %2 = arith.cmpi ne, %1, %c0_i32_0 : i32
    scf.if %2 {
      %c0_32 = arith.constant 0 : index
      %c0_33 = arith.constant 0 : index
      %75 = vector.load %arg1[%c0_32, %c0_33] : memref<16x128xf32, #tpu.memory_space<vmem>>, vector<16x128xf32>
      %c0_34 = arith.constant 0 : index
      %c0_35 = arith.constant 0 : index
      %76 = vector.load %arg7[%c0_34, %c0_35] : memref<16x128xf32, #tpu.memory_space<vmem>>, vector<16x128xf32>
      tpu.vector_store %arg7[%c0_34, %c0_35], %75 {strides = array<i32>} : memref<16x128xf32, #tpu.memory_space<vmem>>, vector<16x128xf32>,
    } else {
    }
    %c0 = arith.constant 0 : index
    %c0_1 = arith.constant 0 : index
    %3 = vector.load %arg7[%c0, %c0_1] : memref<16x128xf32, #tpu.memory_space<vmem>>, vector<16x128xf32>
    %c0_2 = arith.constant 0 : index
    %c0_3 = arith.constant 0 : index
    %4 = vector.load %arg2[%c0_2, %c0_3] : memref<16x16xbf16, #tpu.memory_space<vmem>>, vector<16x16xbf16>
    %5 = arith.truncf %3 : vector<16x128xf32> to vector<16x128xbf16>
    %cst = arith.constant dense<0.000000e+00> : vector<16x128xf32>
    %6 = tpu.matmul %4, %5, %cst {dimension_numbers = #tpu.dot_dimension_numbers<[1], [0], [0], [1], [0, 0, 1, 1], [], []>} : vector<16x16xbf16>, vector<16x128xbf16>, vector<16x128xf32> -> vector<16x128xf32>
    %c0_4 = arith.constant 0 : index
    %c0_5 = arith.constant 0 : index
    %c0_6 = arith.constant 0 : index
    %7 = vector.load %arg4[%c0_4, %c0_5, %c0_6] : memref<1x128x128xbf16, #tpu.memory_space<vmem>>, vector<1x128x128xbf16>
    %8 = vector.shape_cast %7 : vector<1x128x128xbf16> to vector<128x128xbf16>
    %c0_7 = arith.constant 0 : index
    %c0_8 = arith.constant 0 : index
    %c0_9 = arith.constant 0 : index
    %9 = vector.load %arg5[%c0_7, %c0_8, %c0_9] : memref<1x128x128xbf16, #tpu.memory_space<vmem>>, vector<1x128x128xbf16>
    %10 = vector.shape_cast %9 : vector<1x128x128xbf16> to vector<128x128xbf16>
    %c0_10 = arith.constant 0 : index
    %c0_11 = arith.constant 0 : index
    %c0_12 = arith.constant 0 : index
    %11 = vector.load %arg6[%c0_10, %c0_11, %c0_12] : memref<1x4x128xf32, #tpu.memory_space<vmem>>, vector<1x4x128xf32>
    %12 = vector.shape_cast %11 : vector<1x4x128xf32> to vector<4x128xf32>
    %13 = vector.extract_strided_slice %12 {offsets = [0, 0], sizes = [1, 128], strides = [1, 1]} : vector<4x128xf32> to vector<1x128xf32>
    %14 = vector.extract_strided_slice %12 {offsets = [1, 0], sizes = [1, 128], strides = [1, 1]} : vector<4x128xf32> to vector<1x128xf32>
    %15 = vector.extract_strided_slice %12 {offsets = [2, 0], sizes = [1, 128], strides = [1, 1]} : vector<4x128xf32> to vector<1x128xf32>
    %16 = vector.extract_strided_slice %12 {offsets = [3, 0], sizes = [1, 128], strides = [1, 1]} : vector<4x128xf32> to vector<1x128xf32>
    %17 = arith.truncf %6 : vector<16x128xf32> to vector<16x128xbf16>
    %cst_13 = arith.constant dense<0.000000e+00> : vector<16x128xf32>
    %18 = tpu.matmul %17, %8, %cst_13 {dimension_numbers = #tpu.dot_dimension_numbers<[1], [0], [0], [1], [0, 0, 1, 1], [], []>} : vector<16x128xbf16>, vector<128x128xbf16>, vector<16x128xf32> -> vector<16x128xf32>
    %cst_14 = arith.constant dense<0.000000e+00> : vector<128xf32>
    %19 = vector.multi_reduction <add>, %18, %cst_14 [0] : vector<16x128xf32> to vector<128xf32>
    %20 = vector.shape_cast %19 : vector<128xf32> to vector<1x128xf32>
    %cst_15 = arith.constant 1.600000e+01 : f32
    %21 = vector.broadcast %cst_15 : f32 to vector<1x128xf32>
    %22 = arith.divf %20, %21 : vector<1x128xf32>
    %23 = arith.mulf %18, %18 : vector<16x128xf32>
    %cst_16 = arith.constant dense<0.000000e+00> : vector<128xf32>
    %24 = vector.multi_reduction <add>, %23, %cst_16 [0] : vector<16x128xf32> to vector<128xf32>
    %25 = vector.shape_cast %24 : vector<128xf32> to vector<1x128xf32>
    %cst_17 = arith.constant 1.600000e+01 : f32
    %26 = vector.broadcast %cst_17 : f32 to vector<1x128xf32>
    %27 = arith.divf %25, %26 : vector<1x128xf32>
    %28 = arith.mulf %22, %22 : vector<1x128xf32>
    %29 = arith.subf %27, %28 : vector<1x128xf32>
    %cst_18 = arith.constant 0.000000e+00 : f32
    %30 = vector.broadcast %cst_18 : f32 to vector<1x128xf32>
    %31 = arith.maximumf %29, %30 : vector<1x128xf32>
    %cst_19 = arith.constant 9.99999974E-6 : f32
    %32 = vector.broadcast %cst_19 : f32 to vector<1x128xf32>
    %33 = arith.addf %31, %32 : vector<1x128xf32>
    %34 = math.rsqrt %33 : vector<1x128xf32>
    %35 = arith.mulf %13, %34 : vector<1x128xf32>
    %36 = arith.mulf %22, %35 : vector<1x128xf32>
    %37 = arith.subf %14, %36 : vector<1x128xf32>
    %38 = vector.broadcast %35 : vector<1x128xf32> to vector<16x128xf32>
    %39 = arith.mulf %18, %38 : vector<16x128xf32>
    %40 = vector.broadcast %37 : vector<1x128xf32> to vector<16x128xf32>
    %41 = arith.addf %39, %40 : vector<16x128xf32>
    %cst_20 = arith.constant 0.000000e+00 : f32
    %42 = vector.broadcast %cst_20 : f32 to vector<16x128xf32>
    %43 = arith.maximumf %41, %42 : vector<16x128xf32>
    %44 = arith.truncf %43 : vector<16x128xf32> to vector<16x128xbf16>
    %cst_21 = arith.constant dense<0.000000e+00> : vector<16x128xf32>
    %45 = tpu.matmul %44, %10, %cst_21 {dimension_numbers = #tpu.dot_dimension_numbers<[1], [0], [0], [1], [0, 0, 1, 1], [], []>} : vector<16x128xbf16>, vector<128x128xbf16>, vector<16x128xf32> -> vector<16x128xf32>
    %cst_22 = arith.constant dense<0.000000e+00> : vector<128xf32>
    %46 = vector.multi_reduction <add>, %45, %cst_22 [0] : vector<16x128xf32> to vector<128xf32>
    %47 = vector.shape_cast %46 : vector<128xf32> to vector<1x128xf32>
    %cst_23 = arith.constant 1.600000e+01 : f32
    %48 = vector.broadcast %cst_23 : f32 to vector<1x128xf32>
    %49 = arith.divf %47, %48 : vector<1x128xf32>
    %50 = arith.mulf %45, %45 : vector<16x128xf32>
    %cst_24 = arith.constant dense<0.000000e+00> : vector<128xf32>
    %51 = vector.multi_reduction <add>, %50, %cst_24 [0] : vector<16x128xf32> to vector<128xf32>
    %52 = vector.shape_cast %51 : vector<128xf32> to vector<1x128xf32>
    %cst_25 = arith.constant 1.600000e+01 : f32
    %53 = vector.broadcast %cst_25 : f32 to vector<1x128xf32>
    %54 = arith.divf %52, %53 : vector<1x128xf32>
    %55 = arith.mulf %49, %49 : vector<1x128xf32>
    %56 = arith.subf %54, %55 : vector<1x128xf32>
    %cst_26 = arith.constant 0.000000e+00 : f32
    %57 = vector.broadcast %cst_26 : f32 to vector<1x128xf32>
    %58 = arith.maximumf %56, %57 : vector<1x128xf32>
    %cst_27 = arith.constant 9.99999974E-6 : f32
    %59 = vector.broadcast %cst_27 : f32 to vector<1x128xf32>
    %60 = arith.addf %58, %59 : vector<1x128xf32>
    %61 = math.rsqrt %60 : vector<1x128xf32>
    %62 = arith.mulf %15, %61 : vector<1x128xf32>
    %63 = arith.mulf %49, %62 : vector<1x128xf32>
    %64 = arith.subf %16, %63 : vector<1x128xf32>
    %65 = vector.broadcast %62 : vector<1x128xf32> to vector<16x128xf32>
    %66 = arith.mulf %45, %65 : vector<16x128xf32>
    %67 = vector.broadcast %64 : vector<1x128xf32> to vector<16x128xf32>
    %68 = arith.addf %66, %67 : vector<16x128xf32>
    %cst_28 = arith.constant 0.000000e+00 : f32
    %69 = vector.broadcast %cst_28 : f32 to vector<16x128xf32>
    %70 = arith.maximumf %68, %69 : vector<16x128xf32>
    %c0_29 = arith.constant 0 : index
    %c0_30 = arith.constant 0 : index
    %71 = vector.load %arg7[%c0_29, %c0_30] : memref<16x128xf32, #tpu.memory_space<vmem>>, vector<16x128xf32>
    tpu.vector_store %arg7[%c0_29, %c0_30], %70 {strides = array<i32>} : memref<16x128xf32, #tpu.memory_space<vmem>>, vector<16x128xf32>,
    %c1_i32 = arith.constant 1 : i32
    %72 = arith.cmpi eq, %arg0, %c1_i32 : i32
    %73 = arith.extui %72 : i1 to i32
    %c0_i32_31 = arith.constant 0 : i32
    %74 = arith.cmpi ne, %73, %c0_i32_31 : i32
    scf.if %74 {
      %c0_32 = arith.constant 0 : index
      %c0_33 = arith.constant 0 : index
      %75 = vector.load %arg3[%c0_32, %c0_33] : memref<2x16xf32, #tpu.memory_space<vmem>>, vector<2x16xf32>
      %cst_34 = arith.constant dense<0.000000e+00> : vector<2x128xf32>
      %76 = tpu.matmul %75, %70, %cst_34 {dimension_numbers = #tpu.dot_dimension_numbers<[1], [0], [0], [1], [0, 0, 1, 1], [], []>} : vector<2x16xf32>, vector<16x128xf32>, vector<2x128xf32> -> vector<2x128xf32>
      %c0_35 = arith.constant 0 : index
      %c0_36 = arith.constant 0 : index
      %77 = vector.load %arg8[%c0_35, %c0_36] : memref<2x128xf32, #tpu.memory_space<vmem>>, vector<2x128xf32>
      tpu.vector_store %arg8[%c0_35, %c0_36], %76 {strides = array<i32>} : memref<2x128xf32, #tpu.memory_space<vmem>>, vector<2x128xf32>,
    } else {
    }
    return
  }
  func.func @transform_0(%arg0: i32) -> (i32, i32) {
    %c0_i32 = arith.constant 0 : i32
    %c0_i32_0 = arith.constant 0 : i32
    %c0_i32_1 = arith.constant 0 : i32
    return %c0_i32, %c0_i32_0 : i32, i32
  }
  func.func @transform_1(%arg0: i32) -> (i32, i32) {
    %c0_i32 = arith.constant 0 : i32
    %c0_i32_0 = arith.constant 0 : i32
    %c0_i32_1 = arith.constant 0 : i32
    return %c0_i32, %c0_i32_0 : i32, i32
  }
  func.func @transform_2(%arg0: i32) -> (i32, i32) {
    %c0_i32 = arith.constant 0 : i32
    %c0_i32_0 = arith.constant 0 : i32
    %c0_i32_1 = arith.constant 0 : i32
    return %c0_i32, %c0_i32_0 : i32, i32
  }
  func.func @transform_3(%arg0: i32) -> (i32, i32, i32) {
    %c0_i32 = arith.constant 0 : i32
    %c0_i32_0 = arith.constant 0 : i32
    %c0_i32_1 = arith.constant 0 : i32
    return %arg0, %c0_i32, %c0_i32_0 : i32, i32, i32
  }
  func.func @transform_4(%arg0: i32) -> (i32, i32, i32) {
    %c0_i32 = arith.constant 0 : i32
    %c0_i32_0 = arith.constant 0 : i32
    %c0_i32_1 = arith.constant 0 : i32
    return %arg0, %c0_i32, %c0_i32_0 : i32, i32, i32
  }
  func.func @transform_5(%arg0: i32) -> (i32, i32, i32) {
    %c0_i32 = arith.constant 0 : i32
    %c0_i32_0 = arith.constant 0 : i32
    %c0_i32_1 = arith.constant 0 : i32
    return %arg0, %c0_i32, %c0_i32_0 : i32, i32, i32
  }
  func.func @transform_6(%arg0: i32) -> (i32, i32) {
    %c0_i32 = arith.constant 0 : i32
    %c0_i32_0 = arith.constant 0 : i32
    %c0_i32_1 = arith.constant 0 : i32
    return %c0_i32, %c0_i32_0 : i32, i32
  }
  func.func @transform_7(%arg0: i32) -> (i32, i32) {
    %c0_i32 = arith.constant 0 : i32
    %c0_i32_0 = arith.constant 0 : i32
    %c0_i32_1 = arith.constant 0 : i32
    return %c0_i32, %c0_i32_0 : i32, i32
  }
}

module attributes {stable_mosaic.version = 11 : i64} {
  func.func @_graph_cnn_kernel(%arg0: i32, %arg1: memref<16x128xf32, #tpu.memory_space<vmem>>, %arg2: memref<16x16xbf16, #tpu.memory_space<vmem>>, %arg3: memref<2x16xf32, #tpu.memory_space<vmem>>, %arg4: memref<1x128x128xbf16, #tpu.memory_space<vmem>>, %arg5: memref<1x128x128xbf16, #tpu.memory_space<vmem>>, %arg6: memref<1x4x128xf32, #tpu.memory_space<vmem>>, %arg7: memref<16x128xf32, #tpu.memory_space<vmem>>, %arg8: memref<2x128xf32, #tpu.memory_space<vmem>>) attributes {dimension_semantics = [#tpu.dimension_semantics<arbitrary>], iteration_bounds = array<i64: 2>, scalar_prefetch = 0 : i64, scratch_operands = 0 : i64, tpu.core_type = #tpu.core_type<tc>, window_params = [{pipeline_mode = #tpu.pipeline_mode<synchronous>, transform_indices = @transform_0, window_bounds = array<i64: 16, 128>}, {pipeline_mode = #tpu.pipeline_mode<synchronous>, transform_indices = @transform_1, window_bounds = array<i64: 16, 16>}, {pipeline_mode = #tpu.pipeline_mode<synchronous>, transform_indices = @transform_2, window_bounds = array<i64: 2, 16>}, {transform_indices = @transform_3, window_bounds = array<i64: 1, 128, 128>}, {transform_indices = @transform_4, window_bounds = array<i64: 1, 128, 128>}, {transform_indices = @transform_5, window_bounds = array<i64: 1, 4, 128>}, {pipeline_mode = #tpu.pipeline_mode<synchronous>, transform_indices = @transform_6, window_bounds = array<i64: 16, 128>}, {pipeline_mode = #tpu.pipeline_mode<synchronous>, transform_indices = @transform_7, window_bounds = array<i64: 2, 128>}]} {
    %c0_i32 = arith.constant 0 : i32
    %0 = arith.cmpi eq, %arg0, %c0_i32 : i32
    %1 = arith.extui %0 : i1 to i32
    %c0_i32_0 = arith.constant 0 : i32
    %2 = arith.cmpi ne, %1, %c0_i32_0 : i32
    scf.if %2 {
      %c0_32 = arith.constant 0 : index
      %c0_33 = arith.constant 0 : index
      %75 = vector.load %arg1[%c0_32, %c0_33] : memref<16x128xf32, #tpu.memory_space<vmem>>, vector<16x128xf32>
      %c0_34 = arith.constant 0 : index
      %c0_35 = arith.constant 0 : index
      %76 = vector.load %arg7[%c0_34, %c0_35] : memref<16x128xf32, #tpu.memory_space<vmem>>, vector<16x128xf32>
      tpu.vector_store %arg7[%c0_34, %c0_35], %75 {strides = array<i32>} : memref<16x128xf32, #tpu.memory_space<vmem>>, vector<16x128xf32>,
    } else {
    }
    %c0 = arith.constant 0 : index
    %c0_1 = arith.constant 0 : index
    %3 = vector.load %arg7[%c0, %c0_1] : memref<16x128xf32, #tpu.memory_space<vmem>>, vector<16x128xf32>
    %c0_2 = arith.constant 0 : index
    %c0_3 = arith.constant 0 : index
    %4 = vector.load %arg2[%c0_2, %c0_3] : memref<16x16xbf16, #tpu.memory_space<vmem>>, vector<16x16xbf16>
    %5 = arith.truncf %3 : vector<16x128xf32> to vector<16x128xbf16>
    %cst = arith.constant dense<0.000000e+00> : vector<16x128xf32>
    %6 = tpu.matmul %4, %5, %cst {dimension_numbers = #tpu.dot_dimension_numbers<[1], [0], [0], [1], [0, 0, 1, 1], [], []>} : vector<16x16xbf16>, vector<16x128xbf16>, vector<16x128xf32> -> vector<16x128xf32>
    %c0_4 = arith.constant 0 : index
    %c0_5 = arith.constant 0 : index
    %c0_6 = arith.constant 0 : index
    %7 = vector.load %arg4[%c0_4, %c0_5, %c0_6] : memref<1x128x128xbf16, #tpu.memory_space<vmem>>, vector<1x128x128xbf16>
    %8 = vector.shape_cast %7 : vector<1x128x128xbf16> to vector<128x128xbf16>
    %c0_7 = arith.constant 0 : index
    %c0_8 = arith.constant 0 : index
    %c0_9 = arith.constant 0 : index
    %9 = vector.load %arg5[%c0_7, %c0_8, %c0_9] : memref<1x128x128xbf16, #tpu.memory_space<vmem>>, vector<1x128x128xbf16>
    %10 = vector.shape_cast %9 : vector<1x128x128xbf16> to vector<128x128xbf16>
    %c0_10 = arith.constant 0 : index
    %c0_11 = arith.constant 0 : index
    %c0_12 = arith.constant 0 : index
    %11 = vector.load %arg6[%c0_10, %c0_11, %c0_12] : memref<1x4x128xf32, #tpu.memory_space<vmem>>, vector<1x4x128xf32>
    %12 = vector.shape_cast %11 : vector<1x4x128xf32> to vector<4x128xf32>
    %13 = vector.extract_strided_slice %12 {offsets = [0, 0], sizes = [1, 128], strides = [1, 1]} : vector<4x128xf32> to vector<1x128xf32>
    %14 = vector.extract_strided_slice %12 {offsets = [1, 0], sizes = [1, 128], strides = [1, 1]} : vector<4x128xf32> to vector<1x128xf32>
    %15 = vector.extract_strided_slice %12 {offsets = [2, 0], sizes = [1, 128], strides = [1, 1]} : vector<4x128xf32> to vector<1x128xf32>
    %16 = vector.extract_strided_slice %12 {offsets = [3, 0], sizes = [1, 128], strides = [1, 1]} : vector<4x128xf32> to vector<1x128xf32>
    %17 = arith.truncf %6 : vector<16x128xf32> to vector<16x128xbf16>
    %cst_13 = arith.constant dense<0.000000e+00> : vector<16x128xf32>
    %18 = tpu.matmul %17, %8, %cst_13 {dimension_numbers = #tpu.dot_dimension_numbers<[1], [0], [0], [1], [0, 0, 1, 1], [], []>} : vector<16x128xbf16>, vector<128x128xbf16>, vector<16x128xf32> -> vector<16x128xf32>
    %cst_14 = arith.constant dense<0.000000e+00> : vector<128xf32>
    %19 = vector.multi_reduction <add>, %18, %cst_14 [0] : vector<16x128xf32> to vector<128xf32>
    %20 = vector.shape_cast %19 : vector<128xf32> to vector<1x128xf32>
    %cst_15 = arith.constant 1.600000e+01 : f32
    %21 = vector.broadcast %cst_15 : f32 to vector<1x128xf32>
    %22 = arith.divf %20, %21 : vector<1x128xf32>
    %23 = arith.mulf %18, %18 : vector<16x128xf32>
    %cst_16 = arith.constant dense<0.000000e+00> : vector<128xf32>
    %24 = vector.multi_reduction <add>, %23, %cst_16 [0] : vector<16x128xf32> to vector<128xf32>
    %25 = vector.shape_cast %24 : vector<128xf32> to vector<1x128xf32>
    %cst_17 = arith.constant 1.600000e+01 : f32
    %26 = vector.broadcast %cst_17 : f32 to vector<1x128xf32>
    %27 = arith.divf %25, %26 : vector<1x128xf32>
    %28 = arith.mulf %22, %22 : vector<1x128xf32>
    %29 = arith.subf %27, %28 : vector<1x128xf32>
    %cst_18 = arith.constant 0.000000e+00 : f32
    %30 = vector.broadcast %cst_18 : f32 to vector<1x128xf32>
    %31 = arith.maximumf %29, %30 : vector<1x128xf32>
    %cst_19 = arith.constant 9.99999974E-6 : f32
    %32 = vector.broadcast %cst_19 : f32 to vector<1x128xf32>
    %33 = arith.addf %31, %32 : vector<1x128xf32>
    %34 = math.rsqrt %33 : vector<1x128xf32>
    %35 = arith.mulf %13, %34 : vector<1x128xf32>
    %36 = arith.mulf %22, %35 : vector<1x128xf32>
    %37 = arith.subf %14, %36 : vector<1x128xf32>
    %38 = vector.broadcast %35 : vector<1x128xf32> to vector<16x128xf32>
    %39 = arith.mulf %18, %38 : vector<16x128xf32>
    %40 = vector.broadcast %37 : vector<1x128xf32> to vector<16x128xf32>
    %41 = arith.addf %39, %40 : vector<16x128xf32>
    %cst_20 = arith.constant 0.000000e+00 : f32
    %42 = vector.broadcast %cst_20 : f32 to vector<16x128xf32>
    %43 = arith.maximumf %41, %42 : vector<16x128xf32>
    %44 = arith.truncf %43 : vector<16x128xf32> to vector<16x128xbf16>
    %cst_21 = arith.constant dense<0.000000e+00> : vector<16x128xf32>
    %45 = tpu.matmul %44, %10, %cst_21 {dimension_numbers = #tpu.dot_dimension_numbers<[1], [0], [0], [1], [0, 0, 1, 1], [], []>} : vector<16x128xbf16>, vector<128x128xbf16>, vector<16x128xf32> -> vector<16x128xf32>
    %cst_22 = arith.constant dense<0.000000e+00> : vector<128xf32>
    %46 = vector.multi_reduction <add>, %45, %cst_22 [0] : vector<16x128xf32> to vector<128xf32>
    %47 = vector.shape_cast %46 : vector<128xf32> to vector<1x128xf32>
    %cst_23 = arith.constant 1.600000e+01 : f32
    %48 = vector.broadcast %cst_23 : f32 to vector<1x128xf32>
    %49 = arith.divf %47, %48 : vector<1x128xf32>
    %50 = arith.mulf %45, %45 : vector<16x128xf32>
    %cst_24 = arith.constant dense<0.000000e+00> : vector<128xf32>
    %51 = vector.multi_reduction <add>, %50, %cst_24 [0] : vector<16x128xf32> to vector<128xf32>
    %52 = vector.shape_cast %51 : vector<128xf32> to vector<1x128xf32>
    %cst_25 = arith.constant 1.600000e+01 : f32
    %53 = vector.broadcast %cst_25 : f32 to vector<1x128xf32>
    %54 = arith.divf %52, %53 : vector<1x128xf32>
    %55 = arith.mulf %49, %49 : vector<1x128xf32>
    %56 = arith.subf %54, %55 : vector<1x128xf32>
    %cst_26 = arith.constant 0.000000e+00 : f32
    %57 = vector.broadcast %cst_26 : f32 to vector<1x128xf32>
    %58 = arith.maximumf %56, %57 : vector<1x128xf32>
    %cst_27 = arith.constant 9.99999974E-6 : f32
    %59 = vector.broadcast %cst_27 : f32 to vector<1x128xf32>
    %60 = arith.addf %58, %59 : vector<1x128xf32>
    %61 = math.rsqrt %60 : vector<1x128xf32>
    %62 = arith.mulf %15, %61 : vector<1x128xf32>
    %63 = arith.mulf %49, %62 : vector<1x128xf32>
    %64 = arith.subf %16, %63 : vector<1x128xf32>
    %65 = vector.broadcast %62 : vector<1x128xf32> to vector<16x128xf32>
    %66 = arith.mulf %45, %65 : vector<16x128xf32>
    %67 = vector.broadcast %64 : vector<1x128xf32> to vector<16x128xf32>
    %68 = arith.addf %66, %67 : vector<16x128xf32>
    %cst_28 = arith.constant 0.000000e+00 : f32
    %69 = vector.broadcast %cst_28 : f32 to vector<16x128xf32>
    %70 = arith.maximumf %68, %69 : vector<16x128xf32>
    %c0_29 = arith.constant 0 : index
    %c0_30 = arith.constant 0 : index
    %71 = vector.load %arg7[%c0_29, %c0_30] : memref<16x128xf32, #tpu.memory_space<vmem>>, vector<16x128xf32>
    tpu.vector_store %arg7[%c0_29, %c0_30], %70 {strides = array<i32>} : memref<16x128xf32, #tpu.memory_space<vmem>>, vector<16x128xf32>,
    %c1_i32 = arith.constant 1 : i32
    %72 = arith.cmpi eq, %arg0, %c1_i32 : i32
    %73 = arith.extui %72 : i1 to i32
    %c0_i32_31 = arith.constant 0 : i32
    %74 = arith.cmpi ne, %73, %c0_i32_31 : i32
    scf.if %74 {
      %c0_32 = arith.constant 0 : index
      %c0_33 = arith.constant 0 : index
      %75 = vector.load %arg3[%c0_32, %c0_33] : memref<2x16xf32, #tpu.memory_space<vmem>>, vector<2x16xf32>
      %cst_34 = arith.constant dense<0.000000e+00> : vector<2x128xf32>
      %76 = tpu.matmul %75, %70, %cst_34 {dimension_numbers = #tpu.dot_dimension_numbers<[1], [0], [0], [1], [0, 0, 1, 1], [], []>} : vector<2x16xf32>, vector<16x128xf32>, vector<2x128xf32> -> vector<2x128xf32>
      %c0_35 = arith.constant 0 : index
      %c0_36 = arith.constant 0 : index
      %77 = vector.load %arg8[%c0_35, %c0_36] : memref<2x128xf32, #tpu.memory_space<vmem>>, vector<2x128xf32>
      tpu.vector_store %arg8[%c0_35, %c0_36], %76 {strides = array<i32>} : memref<2x128xf32, #tpu.memory_space<vmem>>, vector<2x128xf32>,
    } else {
    }
    return
  }
  func.func @transform_0(%arg0: i32) -> (i32, i32) {
    %c0_i32 = arith.constant 0 : i32
    %c0_i32_0 = arith.constant 0 : i32
    %c0_i32_1 = arith.constant 0 : i32
    return %c0_i32, %c0_i32_0 : i32, i32
  }
  func.func @transform_1(%arg0: i32) -> (i32, i32) {
    %c0_i32 = arith.constant 0 : i32
    %c0_i32_0 = arith.constant 0 : i32
    %c0_i32_1 = arith.constant 0 : i32
    return %c0_i32, %c0_i32_0 : i32, i32
  }
  func.func @transform_2(%arg0: i32) -> (i32, i32) {
    %c0_i32 = arith.constant 0 : i32
    %c0_i32_0 = arith.constant 0 : i32
    %c0_i32_1 = arith.constant 0 : i32
    return %c0_i32, %c0_i32_0 : i32, i32
  }
  func.func @transform_3(%arg0: i32) -> (i32, i32, i32) {
    %c0_i32 = arith.constant 0 : i32
    %c0_i32_0 = arith.constant 0 : i32
    %c0_i32_1 = arith.constant 0 : i32
    return %arg0, %c0_i32, %c0_i32_0 : i32, i32, i32
  }
  func.func @transform_4(%arg0: i32) -> (i32, i32, i32) {
    %c0_i32 = arith.constant 0 : i32
    %c0_i32_0 = arith.constant 0 : i32
    %c0_i32_1 = arith.constant 0 : i32
    return %arg0, %c0_i32, %c0_i32_0 : i32, i32, i32
  }
  func.func @transform_5(%arg0: i32) -> (i32, i32, i32) {
    %c0_i32 = arith.constant 0 : i32
    %c0_i32_0 = arith.constant 0 : i32
    %c0_i32_1 = arith.constant 0 : i32
    return %arg0, %c0_i32, %c0_i32_0 : i32, i32, i32
  }
  func.func @transform_6(%arg0: i32) -> (i32, i32) {
    %c0_i32 = arith.constant 0 : i32
    %c0_i32_0 = arith.constant 0 : i32
    %c0_i32_1 = arith.constant 0 : i32
    return %c0_i32, %c0_i32_0 : i32, i32
  }
  func.func @transform_7(%arg0: i32) -> (i32, i32) {
    %c0_i32 = arith.constant 0 : i32
    %c0_i32_0 = arith.constant 0 : i32
    %c0_i32_1 = arith.constant 0 : i32
    return %c0_i32, %c0_i32_0 : i32, i32
  }
}

</mosaic_0001>

<llo_original>
// kernel: tpu_custom_call.1
$region0: #{tpu_custom_call.1}
  #allocation0 [shape = 'u32[]', space=smem, size = 0x4, offset = 0x4, fixed_abs, tag = 'smem constant byte address 0x4 - core index']
  #allocation1 [shape = 'u32[144,128]{1,0:T(1,128)}', space=vmem, size = 0x12000, scoped, tag = 'internal scratch']
  %s0 = inlined_call_operand.hbm [shape: f32[16,128], index: 0, kind: input, shape index: {}]
  %s1 = inlined_call_operand.hbm [shape: bf16[16,16], index: 1, kind: input, shape index: {}]
  %s2 = inlined_call_operand.vmem [shape: f32[2,16], index: 2, kind: input, shape index: {}]
  %s3 = inlined_call_operand.hbm [shape: bf16[2,128,128], index: 3, kind: input, shape index: {}]
  %s4 = inlined_call_operand.hbm [shape: bf16[2,128,128], index: 4, kind: input, shape index: {}]
  %s5 = inlined_call_operand.vmem [shape: f32[2,4,128], index: 5, kind: input, shape index: {}]
  %s6 = inlined_call_operand.hbm [shape: f32[16,128], index: 6, kind: output, shape index: {0}]
  %s7 = inlined_call_operand.hbm [shape: f32[2,128], index: 7, kind: output, shape index: {1}]
  %8 = xla_tuple %s6, %s7
  %s9 = sld [smem:[#allocation0]]
  $region89: #{tpu_custom_call.1} parent=0
    _
  %s11 = ssub.s32 1, %s9
  %s12 = scalar_select 0, %s11, %s9
  $region1: #{tpu_custom_call.1} parent=0
    #allocation2 [shape = 'u8[8192]{0}', space=vmem, size = 0x2000, scoped, tag = 'input window, operand 0, single buffered']
    #allocation3 [shape = 's32[2]{0}', space=sflag, size = 0x8, scoped, tag = 'scoped memory for tpu_custom_call.1']
    #allocation4 [shape = 's32[2]{0}', space=sflag, size = 0x8, scoped, tag = 'scoped memory for tpu_custom_call.1']
    #allocation5 [shape = 'u8[4096]{0}', space=vmem, size = 0x1000, scoped, tag = 'input window, operand 1, single buffered']
    #allocation6 [shape = 's32[1]{0}', space=sflag, size = 0x4, scoped, tag = 'scoped memory for tpu_custom_call.1']
    #allocation7 [shape = 'u8[65536]{0}', space=vmem, size = 0x10000, scoped, tag = 'input window, operand 3']
    #allocation8 [shape = 'u8[65536]{0}', space=vmem, size = 0x10000, scoped, tag = 'input window, operand 4']
    #allocation9 [shape = 'u8[8192]{0}', space=vmem, size = 0x2000, scoped, tag = 'output window, operand 0, single buffered']
    #allocation10 [shape = 'u8[1024]{0}', space=vmem, size = 0x400, scoped, tag = 'output window, operand 1, single buffered']
    #allocation11 [shape = 's32[1]{0}', space=sflag, size = 0x4, scoped, tag = 'scoped memory for tpu_custom_call.1']
    %13 = vsyncpa [#allocation3], 0
    %14 = vsyncpa [#allocation6], 0
    %15 = vsyncpa [#allocation4], 0
    %16 = vsyncpa [#allocation11], 0
    loop: start=0, step=1, limit=4
    $region2: #{tpu_custom_call.1} parent=1 // loop_pre_header
      _
    $region3: #{tpu_custom_call.1} parent=1 // loop_header
      %s18 = sphi 0, %s22
      %p19 = scmp.ge.s32.totalorder %s18, 4
      %s26 = sphi 0, %s26
      %s28 = sphi 0, %s26
      %s29 = sphi 0, %s28
      %s43 = sphi 0, %s29
      %s47 = sphi 0, %s47
      %s49 = sphi 0, %s47
      %s50 = sphi 0, %s49
      %s64 = sphi 0, %s50
      %s68 = sphi 0, %s68
      %s70 = sphi 0, %s68
      %s71 = sphi 0, %s70
      %s85 = sphi 0, %s71
      %s91 = sphi 0, %s93
      %s94 = sphi 0, %s91
      %s95 = sphi 0, %s94
      %s111 = sphi 0, %s95
      %s117 = sphi 0, %s119
      %s120 = sphi 0, %s117
      %s121 = sphi 0, %s120
      %s137 = sphi 0, %s121
      %s143 = sphi 0, %s145
      %s146 = sphi 0, %s143
      %s147 = sphi 0, %s146
      %s163 = sphi 0, %s147
      %s167 = sphi 0, %s167
      %s169 = sphi 0, %s167
      %s170 = sphi 0, %s169
      %s184 = sphi 0, %s170
      %s188 = sphi 0, %s188
      %s190 = sphi 0, %s188
      %s191 = sphi 0, %s190
      %s205 = sphi 0, %s191
    $region4: #{tpu_custom_call.1} parent=1 // loop_header_branch
      %21 = sbr.rel (%p19) target = $region8
    $region5: #{tpu_custom_call.1} parent=1 // loop_body
      %s23 = ssub.s32 %s18, 1
      %s24 = ssub.s32 %s18, 2
      %s25 = sadd.s32 %s18, 1
      %s27 = sadd.s32 %s26, 1
      %p30 = scmp.eq.s32.totalorder %s18, 1
      %p31 = scmp.ne.s32.totalorder %s26, %s28
      %p32 = scmp.eq.s32.totalorder %s18, 0
      %p33 = por %p31, %p32
      %p34 = scmp.ne.s32.totalorder %s26, %s28
      %p35 = scmp.eq.s32.totalorder %s23, 1
      %p36 = por %p34, %p35
      %p37 = scmp.ne.s32.totalorder %s28, %s29
      %p38 = scmp.eq.s32.totalorder %s23, 0
      %p39 = por %p37, %p38
      %p40 = scmp.ne.s32.totalorder %s28, %s29
      %p41 = scmp.eq.s32.totalorder %s24, 1
      %p42 = por %p40, %p41
      %p44 = scmp.ne.s32.totalorder %s29, %s43
      %p45 = scmp.eq.s32.totalorder %s24, 0
      %p46 = por %p44, %p45
      %s48 = sadd.s32 %s47, 1
      %p51 = scmp.eq.s32.totalorder %s18, 1
      %p52 = scmp.ne.s32.totalorder %s47, %s49
      %p53 = scmp.eq.s32.totalorder %s18, 0
      %p54 = por %p52, %p53
      %p55 = scmp.ne.s32.totalorder %s47, %s49
      %p56 = scmp.eq.s32.totalorder %s23, 1
      %p57 = por %p55, %p56
      %p58 = scmp.ne.s32.totalorder %s49, %s50
      %p59 = scmp.eq.s32.totalorder %s23, 0
      %p60 = por %p58, %p59
      %p61 = scmp.ne.s32.totalorder %s49, %s50
      %p62 = scmp.eq.s32.totalorder %s24, 1
      %p63 = por %p61, %p62
      %p65 = scmp.ne.s32.totalorder %s50, %s64
      %p66 = scmp.eq.s32.totalorder %s24, 0
      %p67 = por %p65, %p66
      %s69 = sadd.s32 %s68, 1
      %p72 = scmp.eq.s32.totalorder %s18, 1
      %p73 = scmp.ne.s32.totalorder %s68, %s70
      %p74 = scmp.eq.s32.totalorder %s18, 0
      %p75 = por %p73, %p74
      %p76 = scmp.ne.s32.totalorder %s68, %s70
      %p77 = scmp.eq.s32.totalorder %s23, 1
      %p78 = por %p76, %p77
      %p79 = scmp.ne.s32.totalorder %s70, %s71
      %p80 = scmp.eq.s32.totalorder %s23, 0
      %p81 = por %p79, %p80
      %p82 = scmp.ne.s32.totalorder %s70, %s71
      %p83 = scmp.eq.s32.totalorder %s24, 1
      %p84 = por %p82, %p83
      %p86 = scmp.ne.s32.totalorder %s71, %s85
      %p87 = scmp.eq.s32.totalorder %s24, 0
      %p88 = por %p86, %p87
      %s89 = ssub.s32 %s18, %s25
      %p90 = scmp.eq.s32.totalorder %s89, 0
      %s92 = sadd.s32 %s91, 1
      %s93 = scalar_select %p90, %s91, %s92
      %p96 = pneg %p90
      %p97 = scmp.eq.s32.totalorder %s18, 1
      %p98 = por %p96, %p97
      %p99 = scmp.ne.s32.totalorder %s91, %s94
      %p100 = scmp.eq.s32.totalorder %s18, 0
      %p101 = por %p99, %p100
      %p102 = scmp.ne.s32.totalorder %s91, %s94
      %p103 = scmp.eq.s32.totalorder %s23, 1
      %p104 = por %p102, %p103
      %p105 = scmp.ne.s32.totalorder %s94, %s95
      %p106 = scmp.eq.s32.totalorder %s23, 0
      %p107 = por %p105, %p106
      %p108 = scmp.ne.s32.totalorder %s94, %s95
      %p109 = scmp.eq.s32.totalorder %s24, 1
      %p110 = por %p108, %p109
      %p112 = scmp.ne.s32.totalorder %s95, %s111
      %p113 = scmp.eq.s32.totalorder %s24, 0
      %p114 = por %p112, %p113
      %s115 = ssub.s32 %s18, %s25
      %p116 = scmp.eq.s32.totalorder %s115, 0
      %s118 = sadd.s32 %s117, 1
      %s119 = scalar_select %p116, %s117, %s118
      %p122 = pneg %p116
      %p123 = scmp.eq.s32.totalorder %s18, 1
      %p124 = por %p122, %p123
      %p125 = scmp.ne.s32.totalorder %s117, %s120
      %p126 = scmp.eq.s32.totalorder %s18, 0
      %p127 = por %p125, %p126
      %p128 = scmp.ne.s32.totalorder %s117, %s120
      %p129 = scmp.eq.s32.totalorder %s23, 1
      %p130 = por %p128, %p129
      %p131 = scmp.ne.s32.totalorder %s120, %s121
      %p132 = scmp.eq.s32.totalorder %s23, 0
      %p133 = por %p131, %p132
      %p134 = scmp.ne.s32.totalorder %s120, %s121
      %p135 = scmp.eq.s32.totalorder %s24, 1
      %p136 = por %p134, %p135
      %p138 = scmp.ne.s32.totalorder %s121, %s137
      %p139 = scmp.eq.s32.totalorder %s24, 0
      %p140 = por %p138, %p139
      %s141 = ssub.s32 %s18, %s25
      %p142 = scmp.eq.s32.totalorder %s141, 0
      %s144 = sadd.s32 %s143, 1
      %s145 = scalar_select %p142, %s143, %s144
      %p148 = pneg %p142
      %p149 = scmp.eq.s32.totalorder %s18, 1
      %p150 = por %p148, %p149
      %p151 = scmp.ne.s32.totalorder %s143, %s146
      %p152 = scmp.eq.s32.totalorder %s18, 0
      %p153 = por %p151, %p152
      %p154 = scmp.ne.s32.totalorder %s143, %s146
      %p155 = scmp.eq.s32.totalorder %s23, 1
      %p156 = por %p154, %p155
      %p157 = scmp.ne.s32.totalorder %s146, %s147
      %p158 = scmp.eq.s32.totalorder %s23, 0
      %p159 = por %p157, %p158
      %p160 = scmp.ne.s32.totalorder %s146, %s147
      %p161 = scmp.eq.s32.totalorder %s24, 1
      %p162 = por %p160, %p161
      %p164 = scmp.ne.s32.totalorder %s147, %s163
      %p165 = scmp.eq.s32.totalorder %s24, 0
      %p166 = por %p164, %p165
      %s168 = sadd.s32 %s167, 1
      %p171 = scmp.eq.s32.totalorder %s18, 1
      %p172 = scmp.ne.s32.totalorder %s167, %s169
      %p173 = scmp.eq.s32.totalorder %s18, 0
      %p174 = por %p172, %p173
      %p175 = scmp.ne.s32.totalorder %s167, %s169
      %p176 = scmp.eq.s32.totalorder %s23, 1
      %p177 = por %p175, %p176
      %p178 = scmp.ne.s32.totalorder %s169, %s170
      %p179 = scmp.eq.s32.totalorder %s23, 0
      %p180 = por %p178, %p179
      %p181 = scmp.ne.s32.totalorder %s169, %s170
      %p182 = scmp.eq.s32.totalorder %s24, 1
      %p183 = por %p181, %p182
      %p185 = scmp.ne.s32.totalorder %s170, %s184
      %p186 = scmp.eq.s32.totalorder %s24, 0
      %p187 = por %p185, %p186
      %s189 = sadd.s32 %s188, 1
      %p192 = scmp.eq.s32.totalorder %s18, 1
      %p193 = scmp.ne.s32.totalorder %s188, %s190
      %p194 = scmp.eq.s32.totalorder %s18, 0
      %p195 = por %p193, %p194
      %p196 = scmp.ne.s32.totalorder %s188, %s190
      %p197 = scmp.eq.s32.totalorder %s23, 1
      %p198 = por %p196, %p197
      %p199 = scmp.ne.s32.totalorder %s190, %s191
      %p200 = scmp.eq.s32.totalorder %s23, 0
      %p201 = por %p199, %p200
      %p202 = scmp.ne.s32.totalorder %s190, %s191
      %p203 = scmp.eq.s32.totalorder %s24, 1
      %p204 = por %p202, %p203
      %p206 = scmp.ne.s32.totalorder %s191, %s205
      %p207 = scmp.eq.s32.totalorder %s24, 0
      %p208 = por %p206, %p207
      %p209 = scmp.le.s32.totalorder 1, %s18
      %p210 = scmp.lt.s32.totalorder %s18, 3
      %p211 = pnand %p209, %p210
      %p212 = pneg %p211
      // Predicated region
      $region9: #{tpu_custom_call.1} parent=5 // pred_check
        _
      $region10: #{tpu_custom_call.1} parent=5 // pred_check_branch
        %214 = sbr.rel (%p211) target = $region12
      $region11: #{tpu_custom_call.1} parent=5 // pred_region
        %s215 = ssub.s32 %s18, 1
        // Predicated region
        $region13: #{tpu_custom_call.1} parent=11 // pred_check
          %p216 = pneg %p39
        $region14: #{tpu_custom_call.1} parent=11 // pred_check_branch
          %218 = sbr.rel (%p216) target = $region16
        $region15: #{tpu_custom_call.1} parent=11 // pred_region
          %s220 = ssub.s32 256, 256
          %221 = vsyncadd [#allocation3], %s220
          %s222 = sshll.u32 [#allocation2], 4
          %s223 = int_to_ptr.vmem [resolvable:$true] %s222
          %228 = dma.hbm_to_vmem [thread:$0]  %s0, 256, %s223, [#allocation3], 128, 128, 8
        $region16: #{tpu_custom_call.1} parent=11 // pred_fallthru
          _
        // Predicated region
        $region17: #{tpu_custom_call.1} parent=11 // pred_check
          %p229 = pneg %p60
        $region18: #{tpu_custom_call.1} parent=11 // pred_check_branch
          %231 = sbr.rel (%p229) target = $region20
        $region19: #{tpu_custom_call.1} parent=11 // pred_region
          %s233 = ssub.s32 128, 128
          %234 = vsyncadd [#allocation6], %s233
          %s235 = sshll.u32 [#allocation5], 4
          %s236 = int_to_ptr.vmem [resolvable:$true] %s235
          %241 = dma.hbm_to_vmem [thread:$0]  %s1, 128, %s236, [#allocation6], 64, 64, 4
        $region20: #{tpu_custom_call.1} parent=11 // pred_fallthru
          _
        // Predicated region
        $region21: #{tpu_custom_call.1} parent=11 // pred_check
          %p242 = pneg %p81
        $region22: #{tpu_custom_call.1} parent=11 // pred_check_branch
          %244 = sbr.rel (%p242) target = $region24
        $region23: #{tpu_custom_call.1} parent=11 // pred_region
          _
        $region24: #{tpu_custom_call.1} parent=11 // pred_fallthru
          _
      $region12: #{tpu_custom_call.1} parent=5 // pred_fallthru
        _
      %p245 = scmp.lt.s32.totalorder %s18, 2
      // Predicated region
      $region25: #{tpu_custom_call.1} parent=5 // pred_check
        %p246 = pneg %p245
      $region26: #{tpu_custom_call.1} parent=5 // pred_check_branch
        %248 = sbr.rel (%p246) target = $region28
      $region27: #{tpu_custom_call.1} parent=5 // pred_region
        // Predicated region
        $region29: #{tpu_custom_call.1} parent=27 // pred_check
          %p249 = pneg %p101
        $region30: #{tpu_custom_call.1} parent=27 // pred_check_branch
          %251 = sbr.rel (%p249) target = $region32
        $region31: #{tpu_custom_call.1} parent=27 // pred_region
          %s252 = sand.u32 %s18, 1
          %s253 = scalar_lea.sflag [#allocation3], %s252
          %s254 = sand.u32 %s91, 1
          %s255 = smul.addr %s254, 64
          %s256 = scalar_lea.vmem [#allocation7], %s255
          %s258 = ssub.s32 1024, 1024
          %259 = vsyncadd %s253, %s258
          %s260 = smul.addr %s18, 16
          %s261 = smul.addr %s260, 64
          %s262 = scalar_lea.hbm %s3, %s261
          %s263 = sshll.u32 %s256, 4
          %s264 = int_to_ptr.vmem [resolvable:$true] %s263
          %269 = dma.hbm_to_vmem [thread:$0]  %s262, 1024, %s264, %s253, 64, 64, 4
        $region32: #{tpu_custom_call.1} parent=27 // pred_fallthru
          _
        // Predicated region
        $region33: #{tpu_custom_call.1} parent=27 // pred_check
          %p270 = pneg %p127
        $region34: #{tpu_custom_call.1} parent=27 // pred_check_branch
          %272 = sbr.rel (%p270) target = $region36
        $region35: #{tpu_custom_call.1} parent=27 // pred_region
          %s273 = sand.u32 %s18, 1
          %s274 = scalar_lea.sflag [#allocation3], %s273
          %s275 = sand.u32 %s117, 1
          %s276 = smul.addr %s275, 64
          %s277 = scalar_lea.vmem [#allocation8], %s276
          %s279 = ssub.s32 1024, 1024
          %280 = vsyncadd %s274, %s279
          %s281 = smul.addr %s18, 16
          %s282 = smul.addr %s281, 64
          %s283 = scalar_lea.hbm %s4, %s282
          %s284 = sshll.u32 %s277, 4
          %s285 = int_to_ptr.vmem [resolvable:$true] %s284
          %290 = dma.hbm_to_vmem [thread:$0]  %s283, 1024, %s285, %s274, 64, 64, 4
        $region36: #{tpu_custom_call.1} parent=27 // pred_fallthru
          _
        // Predicated region
        $region37: #{tpu_custom_call.1} parent=27 // pred_check
          %p291 = pneg %p153
        $region38: #{tpu_custom_call.1} parent=27 // pred_check_branch
          %293 = sbr.rel (%p291) target = $region40
        $region39: #{tpu_custom_call.1} parent=27 // pred_region
          %p294 = scmp.lt.s32.totalorder %s18, 1
          %s295 = scalar_select %p294, %s18, 1
          %s296 = smul.addr %s295, 4
          %s297 = scalar_lea.vmem %s5, %s296
        $region40: #{tpu_custom_call.1} parent=27 // pred_fallthru
          _
      $region28: #{tpu_custom_call.1} parent=5 // pred_fallthru
        _
      %p298 = scmp.le.s32.totalorder 1, %s18
      %p299 = scmp.lt.s32.totalorder %s18, 3
      %p300 = pnand %p298, %p299
      %p301 = pneg %p300
      // Predicated region
      $region41: #{tpu_custom_call.1} parent=5 // pred_check
        _
      $region42: #{tpu_custom_call.1} parent=5 // pred_check_branch
        %303 = sbr.rel (%p300) target = $region44
      $region43: #{tpu_custom_call.1} parent=5 // pred_region
        %s304 = ssub.s32 %s18, 1
        // Predicated region
        $region45: #{tpu_custom_call.1} parent=43 // pred_check
          %p305 = pneg %p39
        $region46: #{tpu_custom_call.1} parent=43 // pred_check_branch
          %307 = sbr.rel (%p305) target = $region48
        $region47: #{tpu_custom_call.1} parent=43 // pred_region
          %308 = dma.done [#allocation3], 256
        $region48: #{tpu_custom_call.1} parent=43 // pred_fallthru
          _
        // Predicated region
        $region49: #{tpu_custom_call.1} parent=43 // pred_check
          %p309 = pneg %p60
        $region50: #{tpu_custom_call.1} parent=43 // pred_check_branch
          %311 = sbr.rel (%p309) target = $region52
        $region51: #{tpu_custom_call.1} parent=43 // pred_region
          %312 = dma.done [#allocation6], 128
        $region52: #{tpu_custom_call.1} parent=43 // pred_fallthru
          _
        %s313 = sand.u32 %s23, 1
        %s314 = scalar_lea.sflag [#allocation3], %s313
        %s315 = sand.u32 %s94, 1
        %s316 = smul.addr %s315, 64
        %s317 = scalar_lea.vmem [#allocation7], %s316
        // Predicated region
        $region53: #{tpu_custom_call.1} parent=43 // pred_check
          %p318 = pneg %p107
        $region54: #{tpu_custom_call.1} parent=43 // pred_check_branch
          %320 = sbr.rel (%p318) target = $region56
        $region55: #{tpu_custom_call.1} parent=43 // pred_region
          %321 = dma.done %s314, 1024
        $region56: #{tpu_custom_call.1} parent=43 // pred_fallthru
          _
        %s322 = sand.u32 %s23, 1
        %s323 = scalar_lea.sflag [#allocation3], %s322
        %s324 = sand.u32 %s120, 1
        %s325 = smul.addr %s324, 64
        %s326 = scalar_lea.vmem [#allocation8], %s325
        // Predicated region
        $region57: #{tpu_custom_call.1} parent=43 // pred_check
          %p327 = pneg %p133
        $region58: #{tpu_custom_call.1} parent=43 // pred_check_branch
          %329 = sbr.rel (%p327) target = $region60
        $region59: #{tpu_custom_call.1} parent=43 // pred_region
          %330 = dma.done %s323, 1024
        $region60: #{tpu_custom_call.1} parent=43 // pred_fallthru
          _
        %p331 = pneg %p39
        %p332 = pneg %p36
        %p333 = pneg %p60
        %p334 = pneg %p57
        %p335 = pneg %p81
        %p336 = pneg %p78
        %s337 = sand.u32 %s23, 1
        %s338 = scalar_lea.sflag [#allocation3], %s337
        %s339 = sand.u32 %s94, 1
        %s340 = smul.addr %s339, 64
        %s341 = scalar_lea.vmem [#allocation7], %s340
        %p342 = pneg %p107
        %p343 = pneg %p104
        %s344 = sand.u32 %s23, 1
        %s345 = scalar_lea.sflag [#allocation3], %s344
        %s346 = sand.u32 %s120, 1
        %s347 = smul.addr %s346, 64
        %s348 = scalar_lea.vmem [#allocation8], %s347
        %p349 = pneg %p133
        %p350 = pneg %p130
        %p351 = scmp.lt.s32.totalorder %s23, 1
        %s352 = scalar_select %p351, %s23, 1
        %s353 = smul.addr %s352, 4
        %s354 = scalar_lea.vmem %s5, %s353
        %p355 = pneg %p159
        %p356 = pneg %p156
        %p357 = pneg %p180
        %p358 = pneg %p177
        %p359 = pneg %p201
        %p360 = pneg %p198
        %p361 = scmp.lt.s32.totalorder %s23, 1
        %s362 = scalar_select %p361, %s23, 1
        %s363 = smul.addr %s362, 4
        %s364 = scalar_lea.vmem %s5, %s363
        %p366 = scmp.eq.s32.totalorder %s23, 0
        // Predicated region
        $region61: #{tpu_custom_call.1} parent=43 // pred_check
          %p367 = pneg %p366
        $region62: #{tpu_custom_call.1} parent=43 // pred_check_branch
          %369 = sbr.rel (%p367) target = $region64
        $region63: #{tpu_custom_call.1} parent=43 // pred_region
          %v370 = vld [vmem:[#allocation2] sm:$0xff]
          %v371 = vld [vmem:[#allocation2 + $0x8] sm:$0xff]
          %372 = vst [vmem:[#allocation9] sm:$0xff] %v370
          %373 = vst [vmem:[#allocation9 + $0x8] sm:$0xff] %v371
        $region64: #{tpu_custom_call.1} parent=43 // pred_fallthru
          _
        %v374 = vld [vmem:[#allocation9] sm:$0xff]
        %v375 = vld [vmem:[#allocation9 + $0x8] sm:$0xff]
        %v376 = vld [vmem:[#allocation5] sm:$0xf]
        %v377 = vld [vmem:[#allocation5 + $0x4] sm:$0xf]
        %v378 = vpack.c.bf16 %v375, %v374
        %v381 = vunpack.c.l.b16 %v376
        %v382 = vunpack.c.l.b16 %v377
        %v383 = vpack.c.b16 %v382, %v381
        %vm384 = vcmask 130048
        %v386 = vsel %vm384, %v383, 0
        %388 = vmatprep.subr.bf16.mxu0 0
        %389 = vmatpush1.bf16.msra.mxu0 %v378
        %390 = vmatprep.subr.bf16.mxu0 0
        %391 = vmatpush1.bf16.msra.mxu0 0
        %392 = vmatprep.subr.bf16.mxu0 0
        %393 = vmatpush1.bf16.msra.mxu0 0
        %394 = vmatprep.subr.bf16.mxu0 0
        %395 = vmatpush1.bf16.msra.mxu0 0
        %396 = vmatprep.subr.bf16.mxu0 0
        %397 = vmatpush1.bf16.msra.mxu0 0
        %398 = vmatprep.subr.bf16.mxu0 0
        %399 = vmatpush1.bf16.msra.mxu0 0
        %400 = vmatprep.subr.bf16.mxu0 0
        %401 = vmatpush1.bf16.msra.mxu0 0
        %402 = vmatprep.subr.bf16.mxu0 0
        %403 = vmatpush1.bf16.msra.mxu0 0
        %404 = vmatprep.subr.bf16.mxu0 0
        %405 = vmatpush1.bf16.msra.mxu0 0
        %406 = vmatprep.subr.bf16.mxu0 0
        %407 = vmatpush1.bf16.msra.mxu0 0
        %408 = vmatprep.subr.bf16.mxu0 0
        %409 = vmatpush1.bf16.msra.mxu0 0
        %410 = vmatprep.subr.bf16.mxu0 0
        %411 = vmatpush1.bf16.msra.mxu0 0
        %412 = vmatprep.subr.bf16.mxu0 0
        %413 = vmatpush1.bf16.msra.mxu0 0
        %414 = vmatprep.subr.bf16.mxu0 0
        %415 = vmatpush1.bf16.msra.mxu0 0
        %416 = vmatprep.subr.bf16.mxu0 0
        %417 = vmatpush1.bf16.msra.mxu0 0
        %418 = vmatprep.subr.bf16.mxu0 0
        %419 = vmatpush1.bf16.msra.mxu0 0
        %420 = vmatprep.mubr.bf16.mxu0 0
        %421 = vmatmul.mubr.bf16.gmra.mrb[0].mxu0 %v386
        %v422 = vpop.f32.mrb[0].mxu0
        %v423 = vadd.f32 0.0, %v422
        %v424 = vpop.f32.mrb[0].mxu0
        %v425 = vpop.f32.mrb[0].mxu0
        %v426 = vadd.f32 0.0, %v425
        %v427 = vpop.f32.mrb[0].mxu0
        %428 = vdwg.mxu0
        %v429 = vld [vmem:[%s317] sm:$0xf]
        %v430 = vld [vmem:[%s317 + $0x4] sm:$0xf]
        %v431 = vld [vmem:[%s317 + $0x8] sm:$0xf]
        %v432 = vld [vmem:[%s317 + $0xc] sm:$0xf]
        %v433 = vld [vmem:[%s317 + $0x10] sm:$0xf]
        %v434 = vld [vmem:[%s317 + $0x14] sm:$0xf]
        %v435 = vld [vmem:[%s317 + $0x18] sm:$0xf]
        %v436 = vld [vmem:[%s317 + $0x1c] sm:$0xf]
        %v437 = vld [vmem:[%s317 + $0x20] sm:$0xf]
        %v438 = vld [vmem:[%s317 + $0x24] sm:$0xf]
        %v439 = vld [vmem:[%s317 + $0x28] sm:$0xf]
        %v440 = vld [vmem:[%s317 + $0x2c] sm:$0xf]
        %v441 = vld [vmem:[%s317 + $0x30] sm:$0xf]
        %v442 = vld [vmem:[%s317 + $0x34] sm:$0xf]
        %v443 = vld [vmem:[%s317 + $0x38] sm:$0xf]
        %v444 = vld [vmem:[%s317 + $0x3c] sm:$0xf]
        %v445 = vld [vmem:[%s326] sm:$0xf]
        %v446 = vld [vmem:[%s326 + $0x4] sm:$0xf]
        %v447 = vld [vmem:[%s326 + $0x8] sm:$0xf]
        %v448 = vld [vmem:[%s326 + $0xc] sm:$0xf]
        %v449 = vld [vmem:[%s326 + $0x10] sm:$0xf]
        %v450 = vld [vmem:[%s326 + $0x14] sm:$0xf]
        %v451 = vld [vmem:[%s326 + $0x18] sm:$0xf]
        %v452 = vld [vmem:[%s326 + $0x1c] sm:$0xf]
        %v453 = vld [vmem:[%s326 + $0x20] sm:$0xf]
        %v454 = vld [vmem:[%s326 + $0x24] sm:$0xf]
        %v455 = vld [vmem:[%s326 + $0x28] sm:$0xf]
        %v456 = vld [vmem:[%s326 + $0x2c] sm:$0xf]
        %v457 = vld [vmem:[%s326 + $0x30] sm:$0xf]
        %v458 = vld [vmem:[%s326 + $0x34] sm:$0xf]
        %v459 = vld [vmem:[%s326 + $0x38] sm:$0xf]
        %v460 = vld [vmem:[%s326 + $0x3c] sm:$0xf]
        %v461 = vld [vmem:[%s364] sm:$0xf]
        %v462 = vpack.c.bf16 %v426, %v423
        %v479 = vunpack.c.l.b16 %v429
        %v480 = vunpack.c.l.b16 %v430
        %v481 = vunpack.c.l.b16 %v431
        %v482 = vunpack.c.l.b16 %v432
        %v483 = vunpack.c.l.b16 %v433
        %v484 = vunpack.c.l.b16 %v434
        %v485 = vunpack.c.l.b16 %v435
        %v486 = vunpack.c.l.b16 %v436
        %v487 = vunpack.c.l.b16 %v437
        %v488 = vunpack.c.l.b16 %v438
        %v489 = vunpack.c.l.b16 %v439
        %v490 = vunpack.c.l.b16 %v440
        %v491 = vunpack.c.l.b16 %v441
        %v492 = vunpack.c.l.b16 %v442
        %v493 = vunpack.c.l.b16 %v443
        %v494 = vunpack.c.l.b16 %v444
        %v495 = vpack.c.b16 %v480, %v479
        %v496 = vpack.c.b16 %v482, %v481
        %v497 = vpack.c.b16 %v484, %v483
        %v498 = vpack.c.b16 %v486, %v485
        %v499 = vpack.c.b16 %v488, %v487
        %v500 = vpack.c.b16 %v490, %v489
        %v501 = vpack.c.b16 %v492, %v491
        %v502 = vpack.c.b16 %v494, %v493
        %511 = vmatprep.subr.bf16.mxu0 0
        %512 = vmatpush1.bf16.msra.mxu0 %v495
        %513 = vmatprep.subr.bf16.mxu0 0
        %514 = vmatpush1.bf16.msra.mxu0 %v496
        %515 = vmatprep.subr.bf16.mxu0 0
        %516 = vmatpush1.bf16.msra.mxu0 %v497
        %517 = vmatprep.subr.bf16.mxu0 0
        %518 = vmatpush1.bf16.msra.mxu0 %v498
        %519 = vmatprep.subr.bf16.mxu0 0
        %520 = vmatpush1.bf16.msra.mxu0 %v499
        %521 = vmatprep.subr.bf16.mxu0 0
        %522 = vmatpush1.bf16.msra.mxu0 %v500
        %523 = vmatprep.subr.bf16.mxu0 0
        %524 = vmatpush1.bf16.msra.mxu0 %v501
        %525 = vmatprep.subr.bf16.mxu0 0
        %526 = vmatpush1.bf16.msra.mxu0 %v502
        %527 = vmatprep.subr.bf16.mxu0 0
        %528 = vmatpush1.bf16.msra.mxu0 0
        %529 = vmatprep.subr.bf16.mxu0 0
        %530 = vmatpush1.bf16.msra.mxu0 0
        %531 = vmatprep.subr.bf16.mxu0 0
        %532 = vmatpush1.bf16.msra.mxu0 0
        %533 = vmatprep.subr.bf16.mxu0 0
        %534 = vmatpush1.bf16.msra.mxu0 0
        %535 = vmatprep.subr.bf16.mxu0 0
        %536 = vmatpush1.bf16.msra.mxu0 0
        %537 = vmatprep.subr.bf16.mxu0 0
        %538 = vmatpush1.bf16.msra.mxu0 0
        %539 = vmatprep.subr.bf16.mxu0 0
        %540 = vmatpush1.bf16.msra.mxu0 0
        %541 = vmatprep.subr.bf16.mxu0 0
        %542 = vmatpush1.bf16.msra.mxu0 0
        %543 = vmatprep.mubr.bf16.mxu0 0
        %544 = vmatmul.mubr.bf16.gmra.mrb[0].mxu0 %v462
        %v545 = vpop.f32.mrb[0].mxu0
        %v546 = vadd.f32 0.0, %v545
        %v547 = vpop.f32.mrb[0].mxu0
        %v548 = vpop.f32.mrb[0].mxu0
        %v549 = vadd.f32 0.0, %v548
        %v550 = vpop.f32.mrb[0].mxu0
        %551 = vdwg.mxu0
        %v552 = vadd.f32 %v546, %v549
        %v553 = vrot.slane %v552, 4
        %v554 = vadd.f32 %v552, %v553
        %v555 = vrot.slane %v554, 2
        %v556 = vadd.f32 %v554, %v555
        %v557 = vrot.slane %v556, 1
        %v558 = vadd.f32 %v556, %v557
        %v559 = vrcp.pop 16.0
        %v560 = vmul.f32 %v558, %v559
        %v561 = vmul.f32 %v546, %v546
        %v562 = vmul.f32 %v549, %v549
        %v563 = vadd.f32 %v561, %v562
        %v564 = vrot.slane %v563, 4
        %v565 = vadd.f32 %v563, %v564
        %v566 = vrot.slane %v565, 2
        %v567 = vadd.f32 %v565, %v566
        %v568 = vrot.slane %v567, 1
        %v569 = vadd.f32 %v567, %v568
        %v570 = vmul.f32 %v569, %v559
        %v571 = vmul.f32 %v560, %v560
        %v572 = vsub.f32 %v570, %v571
        %v573 = vmax.f32 %v572, 0.0
        %v574 = vadd.f32 %v573, 1e-05
        %v575 = vrsqrt.pop %v574
        %v576 = vmul.f32 %v461, %v575
        %v577 = vmul.f32 %v560, %v576
        %v579 = vrot.slane %v577, 7
        %v581 = vsub.f32 %v461, %v579
        %v582 = vlaneseq
        %v583 = vshrl.u32 %v582, 7
        %v584 = vsub.s32 0, %v583
        %v585 = vrot.slane %v576, %v584
        %v586 = vmul.f32 %v546, %v585
        %v587 = vmul.f32 %v549, %v585
        %v588 = vlaneseq
        %v589 = vshrl.u32 %v588, 7
        %v590 = vsub.s32 1, %v589
        %v591 = vrot.slane %v581, %v590
        %v592 = vadd.f32 %v586, %v591
        %v593 = vadd.f32 %v587, %v591
        %v594 = vmax.f32 %v592, 0.0
        %v595 = vmax.f32 %v593, 0.0
        %v596 = vpack.c.bf16 %v595, %v594
        %v613 = vunpack.c.l.b16 %v445
        %v614 = vunpack.c.l.b16 %v446
        %v615 = vunpack.c.l.b16 %v447
        %v616 = vunpack.c.l.b16 %v448
        %v617 = vunpack.c.l.b16 %v449
        %v618 = vunpack.c.l.b16 %v450
        %v619 = vunpack.c.l.b16 %v451
        %v620 = vunpack.c.l.b16 %v452
        %v621 = vunpack.c.l.b16 %v453
        %v622 = vunpack.c.l.b16 %v454
        %v623 = vunpack.c.l.b16 %v455
        %v624 = vunpack.c.l.b16 %v456
        %v625 = vunpack.c.l.b16 %v457
        %v626 = vunpack.c.l.b16 %v458
        %v627 = vunpack.c.l.b16 %v459
        %v628 = vunpack.c.l.b16 %v460
        %v629 = vpack.c.b16 %v614, %v613
        %v630 = vpack.c.b16 %v616, %v615
        %v631 = vpack.c.b16 %v618, %v617
        %v632 = vpack.c.b16 %v620, %v619
        %v633 = vpack.c.b16 %v622, %v621
        %v634 = vpack.c.b16 %v624, %v623
        %v635 = vpack.c.b16 %v626, %v625
        %v636 = vpack.c.b16 %v628, %v627
        %645 = vmatprep.subr.bf16.mxu0 0
        %646 = vmatpush1.bf16.msra.mxu0 %v629
        %647 = vmatprep.subr.bf16.mxu0 0
        %648 = vmatpush1.bf16.msra.mxu0 %v630
        %649 = vmatprep.subr.bf16.mxu0 0
        %650 = vmatpush1.bf16.msra.mxu0 %v631
        %651 = vmatprep.subr.bf16.mxu0 0
        %652 = vmatpush1.bf16.msra.mxu0 %v632
        %653 = vmatprep.subr.bf16.mxu0 0
        %654 = vmatpush1.bf16.msra.mxu0 %v633
        %655 = vmatprep.subr.bf16.mxu0 0
        %656 = vmatpush1.bf16.msra.mxu0 %v634
        %657 = vmatprep.subr.bf16.mxu0 0
        %658 = vmatpush1.bf16.msra.mxu0 %v635
        %659 = vmatprep.subr.bf16.mxu0 0
        %660 = vmatpush1.bf16.msra.mxu0 %v636
        %661 = vmatprep.subr.bf16.mxu0 0
        %662 = vmatpush1.bf16.msra.mxu0 0
        %663 = vmatprep.subr.bf16.mxu0 0
        %664 = vmatpush1.bf16.msra.mxu0 0
        %665 = vmatprep.subr.bf16.mxu0 0
        %666 = vmatpush1.bf16.msra.mxu0 0
        %667 = vmatprep.subr.bf16.mxu0 0
        %668 = vmatpush1.bf16.msra.mxu0 0
        %669 = vmatprep.subr.bf16.mxu0 0
        %670 = vmatpush1.bf16.msra.mxu0 0
        %671 = vmatprep.subr.bf16.mxu0 0
        %672 = vmatpush1.bf16.msra.mxu0 0
        %673 = vmatprep.subr.bf16.mxu0 0
        %674 = vmatpush1.bf16.msra.mxu0 0
        %675 = vmatprep.subr.bf16.mxu0 0
        %676 = vmatpush1.bf16.msra.mxu0 0
        %677 = vmatprep.mubr.bf16.mxu0 0
        %678 = vmatmul.mubr.bf16.gmra.mrb[0].mxu0 %v596
        %v679 = vpop.f32.mrb[0].mxu0
        %v680 = vadd.f32 0.0, %v679
        %v681 = vpop.f32.mrb[0].mxu0
        %v682 = vpop.f32.mrb[0].mxu0
        %v683 = vadd.f32 0.0, %v682
        %v684 = vpop.f32.mrb[0].mxu0
        %685 = vdwg.mxu0
        %v686 = vadd.f32 %v680, %v683
        %v687 = vrot.slane %v686, 4
        %v688 = vadd.f32 %v686, %v687
        %v689 = vrot.slane %v688, 2
        %v690 = vadd.f32 %v688, %v689
        %v691 = vrot.slane %v690, 1
        %v692 = vadd.f32 %v690, %v691
        %v693 = vmul.f32 %v692, %v559
        %v694 = vmul.f32 %v680, %v680
        %v695 = vmul.f32 %v683, %v683
        %v696 = vadd.f32 %v694, %v695
        %v697 = vrot.slane %v696, 4
        %v698 = vadd.f32 %v696, %v697
        %v699 = vrot.slane %v698, 2
        %v700 = vadd.f32 %v698, %v699
        %v701 = vrot.slane %v700, 1
        %v702 = vadd.f32 %v700, %v701
        %v703 = vmul.f32 %v702, %v559
        %v704 = vmul.f32 %v693, %v693
        %v705 = vsub.f32 %v703, %v704
        %v706 = vmax.f32 %v705, 0.0
        %v707 = vadd.f32 %v706, 1e-05
        %v708 = vrsqrt.pop %v707
        %v709 = vmul.f32 %v461, %v708
        %v710 = vmul.f32 %v693, %v709
        %v712 = vrot.slane %v710, 7
        %v714 = vsub.f32 %v461, %v712
        %v715 = vlaneseq
        %v716 = vshrl.u32 %v715, 7
        %v717 = vsub.s32 2, %v716
        %v718 = vrot.slane %v709, %v717
        %v719 = vmul.f32 %v680, %v718
        %v720 = vmul.f32 %v683, %v718
        %v721 = vlaneseq
        %v722 = vshrl.u32 %v721, 7
        %v723 = vsub.s32 3, %v722
        %v724 = vrot.slane %v714, %v723
        %v725 = vadd.f32 %v719, %v724
        %v726 = vadd.f32 %v720, %v724
        %v727 = vmax.f32 %v725, 0.0
        %v728 = vmax.f32 %v726, 0.0
        %729 = vst [vmem:[#allocation9] sm:$0xff] %v727
        %730 = vst [vmem:[#allocation9 + $0x8] sm:$0xff] %v728
        %p731 = scmp.eq.s32.totalorder %s23, 1
        // Predicated region
        $region65: #{tpu_custom_call.1} parent=43 // pred_check
          %p732 = pneg %p731
        $region66: #{tpu_custom_call.1} parent=43 // pred_check_branch
          %734 = sbr.rel (%p732) target = $region68
        $region67: #{tpu_custom_call.1} parent=43 // pred_region
          %v735 = vld [vmem:[%s2] sm:$0x3]
          %v737 = vsel %vm384, %v735, 0
          %739 = vmatprep.subr.mxu0 0.0
          %740 = vmatpush1.msra.mxu0 %v727
          %741 = vmatprep.subr.mxu0 0.0
          %742 = vmatpush1.msra.mxu0 %v728
          %743 = vmatprep.subr.mxu0 0.0
          %744 = vmatpush1.msra.mxu0 0.0
          %745 = vmatprep.subr.mxu0 0.0
          %746 = vmatpush1.msra.mxu0 0.0
          %747 = vmatprep.subr.mxu0 0.0
          %748 = vmatpush1.msra.mxu0 0.0
          %749 = vmatprep.subr.mxu0 0.0
          %750 = vmatpush1.msra.mxu0 0.0
          %751 = vmatprep.subr.mxu0 0.0
          %752 = vmatpush1.msra.mxu0 0.0
          %753 = vmatprep.subr.mxu0 0.0
          %754 = vmatpush1.msra.mxu0 0.0
          %755 = vmatprep.subr.mxu0 0.0
          %756 = vmatpush1.msra.mxu0 0.0
          %757 = vmatprep.subr.mxu0 0.0
          %758 = vmatpush1.msra.mxu0 0.0
          %759 = vmatprep.subr.mxu0 0.0
          %760 = vmatpush1.msra.mxu0 0.0
          %761 = vmatprep.subr.mxu0 0.0
          %762 = vmatpush1.msra.mxu0 0.0
          %763 = vmatprep.subr.mxu0 0.0
          %764 = vmatpush1.msra.mxu0 0.0
          %765 = vmatprep.subr.mxu0 0.0
          %766 = vmatpush1.msra.mxu0 0.0
          %767 = vmatprep.subr.mxu0 0.0
          %768 = vmatpush1.msra.mxu0 0.0
          %769 = vmatprep.subr.mxu0 0.0
          %770 = vmatpush1.msra.mxu0 0.0
          %771 = vmatprep.subr.mxu0 0.0
          %772 = vmatpush1.msra.mxu0 0.0
          %773 = vmatprep.subr.mxu0 0.0
          %774 = vmatpush1.msra.mxu0 0.0
          %775 = vmatprep.subr.mxu0 0.0
          %776 = vmatpush1.msra.mxu0 0.0
          %777 = vmatprep.subr.mxu0 0.0
          %778 = vmatpush1.msra.mxu0 0.0
          %779 = vmatprep.subr.mxu0 0.0
          %780 = vmatpush1.msra.mxu0 0.0
          %781 = vmatprep.subr.mxu0 0.0
          %782 = vmatpush1.msra.mxu0 0.0
          %783 = vmatprep.subr.mxu0 0.0
          %784 = vmatpush1.msra.mxu0 0.0
          %785 = vmatprep.subr.mxu0 0.0
          %786 = vmatpush1.msra.mxu0 0.0
          %787 = vmatprep.subr.mxu0 0.0
          %788 = vmatpush1.msra.mxu0 0.0
          %789 = vmatprep.subr.mxu0 0.0
          %790 = vmatpush1.msra.mxu0 0.0
          %791 = vmatprep.subr.mxu0 0.0
          %792 = vmatpush1.msra.mxu0 0.0
          %793 = vmatprep.subr.mxu0 0.0
          %794 = vmatpush1.msra.mxu0 0.0
          %795 = vmatprep.subr.mxu0 0.0
          %796 = vmatpush1.msra.mxu0 0.0
          %797 = vmatprep.subr.mxu0 0.0
          %798 = vmatpush1.msra.mxu0 0.0
          %799 = vmatprep.subr.mxu0 0.0
          %800 = vmatpush1.msra.mxu0 0.0
          %801 = vmatprep.subr.mxu0 0.0
          %802 = vmatpush1.msra.mxu0 0.0
          %803 = vmatprep.mubr.f32.mxu0 0.0
          %804 = vmatmul.mubr.f32.gmra.mrb[0].mxu0 %v737
          %v805 = vpop.f32.mrb[0].mxu0
          %v806 = vadd.f32 0.0, %v805
          %v807 = vpop.f32.mrb[0].mxu0
          %808 = vdwg.mxu0
          %809 = vst [vmem:[#allocation10] sm:$0x3] %v806
        $region68: #{tpu_custom_call.1} parent=43 // pred_fallthru
          _
        // Predicated region
        $region69: #{tpu_custom_call.1} parent=43 // pred_check
          %p810 = pneg %p177
        $region70: #{tpu_custom_call.1} parent=43 // pred_check_branch
          %812 = sbr.rel (%p810) target = $region72
        $region71: #{tpu_custom_call.1} parent=43 // pred_region
          %s814 = ssub.s32 256, 256
          %815 = vsyncadd [#allocation4], %s814
          %s816 = sshll.u32 [#allocation9], 4
          %s817 = int_to_ptr.vmem [resolvable:$true] %s816
          %822 = dma.vmem_to_hbm [thread:$0]  %s817, 256, %s6, [#allocation4], 128, 128, 8
        $region72: #{tpu_custom_call.1} parent=43 // pred_fallthru
          _
        // Predicated region
        $region73: #{tpu_custom_call.1} parent=43 // pred_check
          %p823 = pneg %p198
        $region74: #{tpu_custom_call.1} parent=43 // pred_check_branch
          %825 = sbr.rel (%p823) target = $region76
        $region75: #{tpu_custom_call.1} parent=43 // pred_region
          %s827 = ssub.s32 32, 32
          %828 = vsyncadd [#allocation11], %s827
          %s830 = sshll.u32 [#allocation10], 4
          %s831 = int_to_ptr.vmem [resolvable:$true] %s830
          %833 = dma.vmem_to_hbm [thread:$0]  %s831, 32, %s7, [#allocation11]
        $region76: #{tpu_custom_call.1} parent=43 // pred_fallthru
          _
        // Predicated region
        $region77: #{tpu_custom_call.1} parent=43 // pred_check
          %p834 = pneg %p177
        $region78: #{tpu_custom_call.1} parent=43 // pred_check_branch
          %836 = sbr.rel (%p834) target = $region80
        $region79: #{tpu_custom_call.1} parent=43 // pred_region
          %837 = dma.done [#allocation4], 256
        $region80: #{tpu_custom_call.1} parent=43 // pred_fallthru
          _
        // Predicated region
        $region81: #{tpu_custom_call.1} parent=43 // pred_check
          %p838 = pneg %p198
        $region82: #{tpu_custom_call.1} parent=43 // pred_check_branch
          %840 = sbr.rel (%p838) target = $region84
        $region83: #{tpu_custom_call.1} parent=43 // pred_region
          %841 = dma.done [#allocation11], 32
        $region84: #{tpu_custom_call.1} parent=43 // pred_fallthru
          _
      $region44: #{tpu_custom_call.1} parent=5 // pred_fallthru
        _
      %p842 = scmp.le.s32.totalorder 2, %s18
      // Predicated region
      $region85: #{tpu_custom_call.1} parent=5 // pred_check
        %p843 = pneg %p842
      $region86: #{tpu_custom_call.1} parent=5 // pred_check_branch
        %845 = sbr.rel (%p843) target = $region88
      $region87: #{tpu_custom_call.1} parent=5 // pred_region
        %s846 = ssub.s32 %s18, 2
      $region88: #{tpu_custom_call.1} parent=5 // pred_fallthru
        _
    $region6: #{tpu_custom_call.1} parent=1 // loop_footer
      %s22 = sadd.s32 1, %s18
    $region7: #{tpu_custom_call.1} parent=1 // loop_footer_branch
      %17 = sbr.rel target = $region3
    $region8: #{tpu_custom_call.1} parent=1 // loop_exit
      _
    %847 = vsyncpa [#allocation3], 1
    %s848 = scalar_lea.sflag [#allocation3], 1
    %849 = vsyncpa %s848, 1
    %850 = vsyncpa [#allocation6], 1
    %851 = vsyncpa [#allocation4], 1
    %s852 = scalar_lea.sflag [#allocation4], 1
    %853 = vsyncpa %s852, 1
    %854 = vsyncpa [#allocation11], 1

// kernel: tpu_custom_call.1
$region0: #{tpu_custom_call.1}
  #allocation0 [shape = 'u32[]', space=smem, size = 0x4, offset = 0x4, fixed_abs, tag = 'smem constant byte address 0x4 - core index']
  #allocation1 [shape = 'u32[144,128]{1,0:T(1,128)}', space=vmem, size = 0x12000, scoped, tag = 'internal scratch']
  %s0 = inlined_call_operand.hbm [shape: f32[16,128], index: 0, kind: input, shape index: {}]
  %s1 = inlined_call_operand.hbm [shape: bf16[16,16], index: 1, kind: input, shape index: {}]
  %s2 = inlined_call_operand.vmem [shape: f32[2,16], index: 2, kind: input, shape index: {}]
  %s3 = inlined_call_operand.hbm [shape: bf16[2,128,128], index: 3, kind: input, shape index: {}]
  %s4 = inlined_call_operand.hbm [shape: bf16[2,128,128], index: 4, kind: input, shape index: {}]
  %s5 = inlined_call_operand.vmem [shape: f32[2,4,128], index: 5, kind: input, shape index: {}]
  %s6 = inlined_call_operand.hbm [shape: f32[16,128], index: 6, kind: output, shape index: {0}]
  %s7 = inlined_call_operand.hbm [shape: f32[2,128], index: 7, kind: output, shape index: {1}]
  %8 = xla_tuple %s6, %s7
  %s9 = sld [smem:[#allocation0]]
  $region89: #{tpu_custom_call.1} parent=0
    _
  %s11 = ssub.s32 1, %s9
  %s12 = scalar_select 0, %s11, %s9
  $region1: #{tpu_custom_call.1} parent=0
    #allocation2 [shape = 'u8[8192]{0}', space=vmem, size = 0x2000, scoped, tag = 'input window, operand 0, single buffered']
    #allocation3 [shape = 's32[2]{0}', space=sflag, size = 0x8, scoped, tag = 'scoped memory for tpu_custom_call.1']
    #allocation4 [shape = 's32[2]{0}', space=sflag, size = 0x8, scoped, tag = 'scoped memory for tpu_custom_call.1']
    #allocation5 [shape = 'u8[4096]{0}', space=vmem, size = 0x1000, scoped, tag = 'input window, operand 1, single buffered']
    #allocation6 [shape = 's32[1]{0}', space=sflag, size = 0x4, scoped, tag = 'scoped memory for tpu_custom_call.1']
    #allocation7 [shape = 'u8[65536]{0}', space=vmem, size = 0x10000, scoped, tag = 'input window, operand 3']
    #allocation8 [shape = 'u8[65536]{0}', space=vmem, size = 0x10000, scoped, tag = 'input window, operand 4']
    #allocation9 [shape = 'u8[8192]{0}', space=vmem, size = 0x2000, scoped, tag = 'output window, operand 0, single buffered']
    #allocation10 [shape = 'u8[1024]{0}', space=vmem, size = 0x400, scoped, tag = 'output window, operand 1, single buffered']
    #allocation11 [shape = 's32[1]{0}', space=sflag, size = 0x4, scoped, tag = 'scoped memory for tpu_custom_call.1']
    %13 = vsyncpa [#allocation3], 0
    %14 = vsyncpa [#allocation6], 0
    %15 = vsyncpa [#allocation4], 0
    %16 = vsyncpa [#allocation11], 0
    loop: start=0, step=1, limit=4
    $region2: #{tpu_custom_call.1} parent=1 // loop_pre_header
      _
    $region3: #{tpu_custom_call.1} parent=1 // loop_header
      %s18 = sphi 0, %s22
      %p19 = scmp.ge.s32.totalorder %s18, 4
      %s26 = sphi 0, %s26
      %s28 = sphi 0, %s26
      %s29 = sphi 0, %s28
      %s43 = sphi 0, %s29
      %s47 = sphi 0, %s47
      %s49 = sphi 0, %s47
      %s50 = sphi 0, %s49
      %s64 = sphi 0, %s50
      %s68 = sphi 0, %s68
      %s70 = sphi 0, %s68
      %s71 = sphi 0, %s70
      %s85 = sphi 0, %s71
      %s91 = sphi 0, %s93
      %s94 = sphi 0, %s91
      %s95 = sphi 0, %s94
      %s111 = sphi 0, %s95
      %s117 = sphi 0, %s119
      %s120 = sphi 0, %s117
      %s121 = sphi 0, %s120
      %s137 = sphi 0, %s121
      %s143 = sphi 0, %s145
      %s146 = sphi 0, %s143
      %s147 = sphi 0, %s146
      %s163 = sphi 0, %s147
      %s167 = sphi 0, %s167
      %s169 = sphi 0, %s167
      %s170 = sphi 0, %s169
      %s184 = sphi 0, %s170
      %s188 = sphi 0, %s188
      %s190 = sphi 0, %s188
      %s191 = sphi 0, %s190
      %s205 = sphi 0, %s191
    $region4: #{tpu_custom_call.1} parent=1 // loop_header_branch
      %21 = sbr.rel (%p19) target = $region8
    $region5: #{tpu_custom_call.1} parent=1 // loop_body
      %s23 = ssub.s32 %s18, 1
      %s24 = ssub.s32 %s18, 2
      %s25 = sadd.s32 %s18, 1
      %s27 = sadd.s32 %s26, 1
      %p30 = scmp.eq.s32.totalorder %s18, 1
      %p31 = scmp.ne.s32.totalorder %s26, %s28
      %p32 = scmp.eq.s32.totalorder %s18, 0
      %p33 = por %p31, %p32
      %p34 = scmp.ne.s32.totalorder %s26, %s28
      %p35 = scmp.eq.s32.totalorder %s23, 1
      %p36 = por %p34, %p35
      %p37 = scmp.ne.s32.totalorder %s28, %s29
      %p38 = scmp.eq.s32.totalorder %s23, 0
      %p39 = por %p37, %p38
      %p40 = scmp.ne.s32.totalorder %s28, %s29
      %p41 = scmp.eq.s32.totalorder %s24, 1
      %p42 = por %p40, %p41
      %p44 = scmp.ne.s32.totalorder %s29, %s43
      %p45 = scmp.eq.s32.totalorder %s24, 0
      %p46 = por %p44, %p45
      %s48 = sadd.s32 %s47, 1
      %p51 = scmp.eq.s32.totalorder %s18, 1
      %p52 = scmp.ne.s32.totalorder %s47, %s49
      %p53 = scmp.eq.s32.totalorder %s18, 0
      %p54 = por %p52, %p53
      %p55 = scmp.ne.s32.totalorder %s47, %s49
      %p56 = scmp.eq.s32.totalorder %s23, 1
      %p57 = por %p55, %p56
      %p58 = scmp.ne.s32.totalorder %s49, %s50
      %p59 = scmp.eq.s32.totalorder %s23, 0
      %p60 = por %p58, %p59
      %p61 = scmp.ne.s32.totalorder %s49, %s50
      %p62 = scmp.eq.s32.totalorder %s24, 1
      %p63 = por %p61, %p62
      %p65 = scmp.ne.s32.totalorder %s50, %s64
      %p66 = scmp.eq.s32.totalorder %s24, 0
      %p67 = por %p65, %p66
      %s69 = sadd.s32 %s68, 1
      %p72 = scmp.eq.s32.totalorder %s18, 1
      %p73 = scmp.ne.s32.totalorder %s68, %s70
      %p74 = scmp.eq.s32.totalorder %s18, 0
      %p75 = por %p73, %p74
      %p76 = scmp.ne.s32.totalorder %s68, %s70
      %p77 = scmp.eq.s32.totalorder %s23, 1
      %p78 = por %p76, %p77
      %p79 = scmp.ne.s32.totalorder %s70, %s71
      %p80 = scmp.eq.s32.totalorder %s23, 0
      %p81 = por %p79, %p80
      %p82 = scmp.ne.s32.totalorder %s70, %s71
      %p83 = scmp.eq.s32.totalorder %s24, 1
      %p84 = por %p82, %p83
      %p86 = scmp.ne.s32.totalorder %s71, %s85
      %p87 = scmp.eq.s32.totalorder %s24, 0
      %p88 = por %p86, %p87
      %s89 = ssub.s32 %s18, %s25
      %p90 = scmp.eq.s32.totalorder %s89, 0
      %s92 = sadd.s32 %s91, 1
      %s93 = scalar_select %p90, %s91, %s92
      %p96 = pneg %p90
      %p97 = scmp.eq.s32.totalorder %s18, 1
      %p98 = por %p96, %p97
      %p99 = scmp.ne.s32.totalorder %s91, %s94
      %p100 = scmp.eq.s32.totalorder %s18, 0
      %p101 = por %p99, %p100
      %p102 = scmp.ne.s32.totalorder %s91, %s94
      %p103 = scmp.eq.s32.totalorder %s23, 1
      %p104 = por %p102, %p103
      %p105 = scmp.ne.s32.totalorder %s94, %s95
      %p106 = scmp.eq.s32.totalorder %s23, 0
      %p107 = por %p105, %p106
      %p108 = scmp.ne.s32.totalorder %s94, %s95
      %p109 = scmp.eq.s32.totalorder %s24, 1
      %p110 = por %p108, %p109
      %p112 = scmp.ne.s32.totalorder %s95, %s111
      %p113 = scmp.eq.s32.totalorder %s24, 0
      %p114 = por %p112, %p113
      %s115 = ssub.s32 %s18, %s25
      %p116 = scmp.eq.s32.totalorder %s115, 0
      %s118 = sadd.s32 %s117, 1
      %s119 = scalar_select %p116, %s117, %s118
      %p122 = pneg %p116
      %p123 = scmp.eq.s32.totalorder %s18, 1
      %p124 = por %p122, %p123
      %p125 = scmp.ne.s32.totalorder %s117, %s120
      %p126 = scmp.eq.s32.totalorder %s18, 0
      %p127 = por %p125, %p126
      %p128 = scmp.ne.s32.totalorder %s117, %s120
      %p129 = scmp.eq.s32.totalorder %s23, 1
      %p130 = por %p128, %p129
      %p131 = scmp.ne.s32.totalorder %s120, %s121
      %p132 = scmp.eq.s32.totalorder %s23, 0
      %p133 = por %p131, %p132
      %p134 = scmp.ne.s32.totalorder %s120, %s121
      %p135 = scmp.eq.s32.totalorder %s24, 1
      %p136 = por %p134, %p135
      %p138 = scmp.ne.s32.totalorder %s121, %s137
      %p139 = scmp.eq.s32.totalorder %s24, 0
      %p140 = por %p138, %p139
      %s141 = ssub.s32 %s18, %s25
      %p142 = scmp.eq.s32.totalorder %s141, 0
      %s144 = sadd.s32 %s143, 1
      %s145 = scalar_select %p142, %s143, %s144
      %p148 = pneg %p142
      %p149 = scmp.eq.s32.totalorder %s18, 1
      %p150 = por %p148, %p149
      %p151 = scmp.ne.s32.totalorder %s143, %s146
      %p152 = scmp.eq.s32.totalorder %s18, 0
      %p153 = por %p151, %p152
      %p154 = scmp.ne.s32.totalorder %s143, %s146
      %p155 = scmp.eq.s32.totalorder %s23, 1
      %p156 = por %p154, %p155
      %p157 = scmp.ne.s32.totalorder %s146, %s147
      %p158 = scmp.eq.s32.totalorder %s23, 0
      %p159 = por %p157, %p158
      %p160 = scmp.ne.s32.totalorder %s146, %s147
      %p161 = scmp.eq.s32.totalorder %s24, 1
      %p162 = por %p160, %p161
      %p164 = scmp.ne.s32.totalorder %s147, %s163
      %p165 = scmp.eq.s32.totalorder %s24, 0
      %p166 = por %p164, %p165
      %s168 = sadd.s32 %s167, 1
      %p171 = scmp.eq.s32.totalorder %s18, 1
      %p172 = scmp.ne.s32.totalorder %s167, %s169
      %p173 = scmp.eq.s32.totalorder %s18, 0
      %p174 = por %p172, %p173
      %p175 = scmp.ne.s32.totalorder %s167, %s169
      %p176 = scmp.eq.s32.totalorder %s23, 1
      %p177 = por %p175, %p176
      %p178 = scmp.ne.s32.totalorder %s169, %s170
      %p179 = scmp.eq.s32.totalorder %s23, 0
      %p180 = por %p178, %p179
      %p181 = scmp.ne.s32.totalorder %s169, %s170
      %p182 = scmp.eq.s32.totalorder %s24, 1
      %p183 = por %p181, %p182
      %p185 = scmp.ne.s32.totalorder %s170, %s184
      %p186 = scmp.eq.s32.totalorder %s24, 0
      %p187 = por %p185, %p186
      %s189 = sadd.s32 %s188, 1
      %p192 = scmp.eq.s32.totalorder %s18, 1
      %p193 = scmp.ne.s32.totalorder %s188, %s190
      %p194 = scmp.eq.s32.totalorder %s18, 0
      %p195 = por %p193, %p194
      %p196 = scmp.ne.s32.totalorder %s188, %s190
      %p197 = scmp.eq.s32.totalorder %s23, 1
      %p198 = por %p196, %p197
      %p199 = scmp.ne.s32.totalorder %s190, %s191
      %p200 = scmp.eq.s32.totalorder %s23, 0
      %p201 = por %p199, %p200
      %p202 = scmp.ne.s32.totalorder %s190, %s191
      %p203 = scmp.eq.s32.totalorder %s24, 1
      %p204 = por %p202, %p203
      %p206 = scmp.ne.s32.totalorder %s191, %s205
      %p207 = scmp.eq.s32.totalorder %s24, 0
      %p208 = por %p206, %p207
      %p209 = scmp.le.s32.totalorder 1, %s18
      %p210 = scmp.lt.s32.totalorder %s18, 3
      %p211 = pnand %p209, %p210
      %p212 = pneg %p211
      // Predicated region
      $region9: #{tpu_custom_call.1} parent=5 // pred_check
        _
      $region10: #{tpu_custom_call.1} parent=5 // pred_check_branch
        %214 = sbr.rel (%p211) target = $region12
      $region11: #{tpu_custom_call.1} parent=5 // pred_region
        %s215 = ssub.s32 %s18, 1
        // Predicated region
        $region13: #{tpu_custom_call.1} parent=11 // pred_check
          %p216 = pneg %p39
        $region14: #{tpu_custom_call.1} parent=11 // pred_check_branch
          %218 = sbr.rel (%p216) target = $region16
        $region15: #{tpu_custom_call.1} parent=11 // pred_region
          %s220 = ssub.s32 256, 256
          %221 = vsyncadd [#allocation3], %s220
          %s222 = sshll.u32 [#allocation2], 4
          %s223 = int_to_ptr.vmem [resolvable:$true] %s222
          %228 = dma.hbm_to_vmem [thread:$0]  %s0, 256, %s223, [#allocation3], 128, 128, 8
        $region16: #{tpu_custom_call.1} parent=11 // pred_fallthru
          _
        // Predicated region
        $region17: #{tpu_custom_call.1} parent=11 // pred_check
          %p229 = pneg %p60
        $region18: #{tpu_custom_call.1} parent=11 // pred_check_branch
          %231 = sbr.rel (%p229) target = $region20
        $region19: #{tpu_custom_call.1} parent=11 // pred_region
          %s233 = ssub.s32 128, 128
          %234 = vsyncadd [#allocation6], %s233
          %s235 = sshll.u32 [#allocation5], 4
          %s236 = int_to_ptr.vmem [resolvable:$true] %s235
          %241 = dma.hbm_to_vmem [thread:$0]  %s1, 128, %s236, [#allocation6], 64, 64, 4
        $region20: #{tpu_custom_call.1} parent=11 // pred_fallthru
          _
        // Predicated region
        $region21: #{tpu_custom_call.1} parent=11 // pred_check
          %p242 = pneg %p81
        $region22: #{tpu_custom_call.1} parent=11 // pred_check_branch
          %244 = sbr.rel (%p242) target = $region24
        $region23: #{tpu_custom_call.1} parent=11 // pred_region
          _
        $region24: #{tpu_custom_call.1} parent=11 // pred_fallthru
          _
      $region12: #{tpu_custom_call.1} parent=5 // pred_fallthru
        _
      %p245 = scmp.lt.s32.totalorder %s18, 2
      // Predicated region
      $region25: #{tpu_custom_call.1} parent=5 // pred_check
        %p246 = pneg %p245
      $region26: #{tpu_custom_call.1} parent=5 // pred_check_branch
        %248 = sbr.rel (%p246) target = $region28
      $region27: #{tpu_custom_call.1} parent=5 // pred_region
        // Predicated region
        $region29: #{tpu_custom_call.1} parent=27 // pred_check
          %p249 = pneg %p101
        $region30: #{tpu_custom_call.1} parent=27 // pred_check_branch
          %251 = sbr.rel (%p249) target = $region32
        $region31: #{tpu_custom_call.1} parent=27 // pred_region
          %s252 = sand.u32 %s18, 1
          %s253 = scalar_lea.sflag [#allocation3], %s252
          %s254 = sand.u32 %s91, 1
          %s255 = smul.addr %s254, 64
          %s256 = scalar_lea.vmem [#allocation7], %s255
          %s258 = ssub.s32 1024, 1024
          %259 = vsyncadd %s253, %s258
          %s260 = smul.addr %s18, 16
          %s261 = smul.addr %s260, 64
          %s262 = scalar_lea.hbm %s3, %s261
          %s263 = sshll.u32 %s256, 4
          %s264 = int_to_ptr.vmem [resolvable:$true] %s263
          %269 = dma.hbm_to_vmem [thread:$0]  %s262, 1024, %s264, %s253, 64, 64, 4
        $region32: #{tpu_custom_call.1} parent=27 // pred_fallthru
          _
        // Predicated region
        $region33: #{tpu_custom_call.1} parent=27 // pred_check
          %p270 = pneg %p127
        $region34: #{tpu_custom_call.1} parent=27 // pred_check_branch
          %272 = sbr.rel (%p270) target = $region36
        $region35: #{tpu_custom_call.1} parent=27 // pred_region
          %s273 = sand.u32 %s18, 1
          %s274 = scalar_lea.sflag [#allocation3], %s273
          %s275 = sand.u32 %s117, 1
          %s276 = smul.addr %s275, 64
          %s277 = scalar_lea.vmem [#allocation8], %s276
          %s279 = ssub.s32 1024, 1024
          %280 = vsyncadd %s274, %s279
          %s281 = smul.addr %s18, 16
          %s282 = smul.addr %s281, 64
          %s283 = scalar_lea.hbm %s4, %s282
          %s284 = sshll.u32 %s277, 4
          %s285 = int_to_ptr.vmem [resolvable:$true] %s284
          %290 = dma.hbm_to_vmem [thread:$0]  %s283, 1024, %s285, %s274, 64, 64, 4
        $region36: #{tpu_custom_call.1} parent=27 // pred_fallthru
          _
        // Predicated region
        $region37: #{tpu_custom_call.1} parent=27 // pred_check
          %p291 = pneg %p153
        $region38: #{tpu_custom_call.1} parent=27 // pred_check_branch
          %293 = sbr.rel (%p291) target = $region40
        $region39: #{tpu_custom_call.1} parent=27 // pred_region
          %p294 = scmp.lt.s32.totalorder %s18, 1
          %s295 = scalar_select %p294, %s18, 1
          %s296 = smul.addr %s295, 4
          %s297 = scalar_lea.vmem %s5, %s296
        $region40: #{tpu_custom_call.1} parent=27 // pred_fallthru
          _
      $region28: #{tpu_custom_call.1} parent=5 // pred_fallthru
        _
      %p298 = scmp.le.s32.totalorder 1, %s18
      %p299 = scmp.lt.s32.totalorder %s18, 3
      %p300 = pnand %p298, %p299
      %p301 = pneg %p300
      // Predicated region
      $region41: #{tpu_custom_call.1} parent=5 // pred_check
        _
      $region42: #{tpu_custom_call.1} parent=5 // pred_check_branch
        %303 = sbr.rel (%p300) target = $region44
      $region43: #{tpu_custom_call.1} parent=5 // pred_region
        %s304 = ssub.s32 %s18, 1
        // Predicated region
        $region45: #{tpu_custom_call.1} parent=43 // pred_check
          %p305 = pneg %p39
        $region46: #{tpu_custom_call.1} parent=43 // pred_check_branch
          %307 = sbr.rel (%p305) target = $region48
        $region47: #{tpu_custom_call.1} parent=43 // pred_region
          %308 = dma.done [#allocation3], 256
        $region48: #{tpu_custom_call.1} parent=43 // pred_fallthru
          _
        // Predicated region
        $region49: #{tpu_custom_call.1} parent=43 // pred_check
          %p309 = pneg %p60
        $region50: #{tpu_custom_call.1} parent=43 // pred_check_branch
          %311 = sbr.rel (%p309) target = $region52
        $region51: #{tpu_custom_call.1} parent=43 // pred_region
          %312 = dma.done [#allocation6], 128
        $region52: #{tpu_custom_call.1} parent=43 // pred_fallthru
          _
        %s313 = sand.u32 %s23, 1
        %s314 = scalar_lea.sflag [#allocation3], %s313
        %s315 = sand.u32 %s94, 1
        %s316 = smul.addr %s315, 64
        %s317 = scalar_lea.vmem [#allocation7], %s316
        // Predicated region
        $region53: #{tpu_custom_call.1} parent=43 // pred_check
          %p318 = pneg %p107
        $region54: #{tpu_custom_call.1} parent=43 // pred_check_branch
          %320 = sbr.rel (%p318) target = $region56
        $region55: #{tpu_custom_call.1} parent=43 // pred_region
          %321 = dma.done %s314, 1024
        $region56: #{tpu_custom_call.1} parent=43 // pred_fallthru
          _
        %s322 = sand.u32 %s23, 1
        %s323 = scalar_lea.sflag [#allocation3], %s322
        %s324 = sand.u32 %s120, 1
        %s325 = smul.addr %s324, 64
        %s326 = scalar_lea.vmem [#allocation8], %s325
        // Predicated region
        $region57: #{tpu_custom_call.1} parent=43 // pred_check
          %p327 = pneg %p133
        $region58: #{tpu_custom_call.1} parent=43 // pred_check_branch
          %329 = sbr.rel (%p327) target = $region60
        $region59: #{tpu_custom_call.1} parent=43 // pred_region
          %330 = dma.done %s323, 1024
        $region60: #{tpu_custom_call.1} parent=43 // pred_fallthru
          _
        %p331 = pneg %p39
        %p332 = pneg %p36
        %p333 = pneg %p60
        %p334 = pneg %p57
        %p335 = pneg %p81
        %p336 = pneg %p78
        %s337 = sand.u32 %s23, 1
        %s338 = scalar_lea.sflag [#allocation3], %s337
        %s339 = sand.u32 %s94, 1
        %s340 = smul.addr %s339, 64
        %s341 = scalar_lea.vmem [#allocation7], %s340
        %p342 = pneg %p107
        %p343 = pneg %p104
        %s344 = sand.u32 %s23, 1
        %s345 = scalar_lea.sflag [#allocation3], %s344
        %s346 = sand.u32 %s120, 1
        %s347 = smul.addr %s346, 64
        %s348 = scalar_lea.vmem [#allocation8], %s347
        %p349 = pneg %p133
        %p350 = pneg %p130
        %p351 = scmp.lt.s32.totalorder %s23, 1
        %s352 = scalar_select %p351, %s23, 1
        %s353 = smul.addr %s352, 4
        %s354 = scalar_lea.vmem %s5, %s353
        %p355 = pneg %p159
        %p356 = pneg %p156
        %p357 = pneg %p180
        %p358 = pneg %p177
        %p359 = pneg %p201
        %p360 = pneg %p198
        %p361 = scmp.lt.s32.totalorder %s23, 1
        %s362 = scalar_select %p361, %s23, 1
        %s363 = smul.addr %s362, 4
        %s364 = scalar_lea.vmem %s5, %s363
        %p366 = scmp.eq.s32.totalorder %s23, 0
        // Predicated region
        $region61: #{tpu_custom_call.1} parent=43 // pred_check
          %p367 = pneg %p366
        $region62: #{tpu_custom_call.1} parent=43 // pred_check_branch
          %369 = sbr.rel (%p367) target = $region64
        $region63: #{tpu_custom_call.1} parent=43 // pred_region
          %v370 = vld [vmem:[#allocation2] sm:$0xff]
          %v371 = vld [vmem:[#allocation2 + $0x8] sm:$0xff]
          %372 = vst [vmem:[#allocation9] sm:$0xff] %v370
          %373 = vst [vmem:[#allocation9 + $0x8] sm:$0xff] %v371
        $region64: #{tpu_custom_call.1} parent=43 // pred_fallthru
          _
        %v374 = vld [vmem:[#allocation9] sm:$0xff]
        %v375 = vld [vmem:[#allocation9 + $0x8] sm:$0xff]
        %v376 = vld [vmem:[#allocation5] sm:$0xf]
        %v377 = vld [vmem:[#allocation5 + $0x4] sm:$0xf]
        %v378 = vpack.c.bf16 %v375, %v374
        %v381 = vunpack.c.l.b16 %v376
        %v382 = vunpack.c.l.b16 %v377
        %v383 = vpack.c.b16 %v382, %v381
        %vm384 = vcmask 130048
        %v386 = vsel %vm384, %v383, 0
        %388 = vmatprep.subr.bf16.mxu0 0
        %389 = vmatpush1.bf16.msra.mxu0 %v378
        %390 = vmatprep.subr.bf16.mxu0 0
        %391 = vmatpush1.bf16.msra.mxu0 0
        %392 = vmatprep.subr.bf16.mxu0 0
        %393 = vmatpush1.bf16.msra.mxu0 0
        %394 = vmatprep.subr.bf16.mxu0 0
        %395 = vmatpush1.bf16.msra.mxu0 0
        %396 = vmatprep.subr.bf16.mxu0 0
        %397 = vmatpush1.bf16.msra.mxu0 0
        %398 = vmatprep.subr.bf16.mxu0 0
        %399 = vmatpush1.bf16.msra.mxu0 0
        %400 = vmatprep.subr.bf16.mxu0 0
        %401 = vmatpush1.bf16.msra.mxu0 0
        %402 = vmatprep.subr.bf16.mxu0 0
        %403 = vmatpush1.bf16.msra.mxu0 0
        %404 = vmatprep.subr.bf16.mxu0 0
        %405 = vmatpush1.bf16.msra.mxu0 0
        %406 = vmatprep.subr.bf16.mxu0 0
        %407 = vmatpush1.bf16.msra.mxu0 0
        %408 = vmatprep.subr.bf16.mxu0 0
        %409 = vmatpush1.bf16.msra.mxu0 0
        %410 = vmatprep.subr.bf16.mxu0 0
        %411 = vmatpush1.bf16.msra.mxu0 0
        %412 = vmatprep.subr.bf16.mxu0 0
        %413 = vmatpush1.bf16.msra.mxu0 0
        %414 = vmatprep.subr.bf16.mxu0 0
        %415 = vmatpush1.bf16.msra.mxu0 0
        %416 = vmatprep.subr.bf16.mxu0 0
        %417 = vmatpush1.bf16.msra.mxu0 0
        %418 = vmatprep.subr.bf16.mxu0 0
        %419 = vmatpush1.bf16.msra.mxu0 0
        %420 = vmatprep.mubr.bf16.mxu0 0
        %421 = vmatmul.mubr.bf16.gmra.mrb[0].mxu0 %v386
        %v422 = vpop.f32.mrb[0].mxu0
        %v423 = vadd.f32 0.0, %v422
        %v424 = vpop.f32.mrb[0].mxu0
        %v425 = vpop.f32.mrb[0].mxu0
        %v426 = vadd.f32 0.0, %v425
        %v427 = vpop.f32.mrb[0].mxu0
        %428 = vdwg.mxu0
        %v429 = vld [vmem:[%s317] sm:$0xf]
        %v430 = vld [vmem:[%s317 + $0x4] sm:$0xf]
        %v431 = vld [vmem:[%s317 + $0x8] sm:$0xf]
        %v432 = vld [vmem:[%s317 + $0xc] sm:$0xf]
        %v433 = vld [vmem:[%s317 + $0x10] sm:$0xf]
        %v434 = vld [vmem:[%s317 + $0x14] sm:$0xf]
        %v435 = vld [vmem:[%s317 + $0x18] sm:$0xf]
        %v436 = vld [vmem:[%s317 + $0x1c] sm:$0xf]
        %v437 = vld [vmem:[%s317 + $0x20] sm:$0xf]
        %v438 = vld [vmem:[%s317 + $0x24] sm:$0xf]
        %v439 = vld [vmem:[%s317 + $0x28] sm:$0xf]
        %v440 = vld [vmem:[%s317 + $0x2c] sm:$0xf]
        %v441 = vld [vmem:[%s317 + $0x30] sm:$0xf]
        %v442 = vld [vmem:[%s317 + $0x34] sm:$0xf]
        %v443 = vld [vmem:[%s317 + $0x38] sm:$0xf]
        %v444 = vld [vmem:[%s317 + $0x3c] sm:$0xf]
        %v445 = vld [vmem:[%s326] sm:$0xf]
        %v446 = vld [vmem:[%s326 + $0x4] sm:$0xf]
        %v447 = vld [vmem:[%s326 + $0x8] sm:$0xf]
        %v448 = vld [vmem:[%s326 + $0xc] sm:$0xf]
        %v449 = vld [vmem:[%s326 + $0x10] sm:$0xf]
        %v450 = vld [vmem:[%s326 + $0x14] sm:$0xf]
        %v451 = vld [vmem:[%s326 + $0x18] sm:$0xf]
        %v452 = vld [vmem:[%s326 + $0x1c] sm:$0xf]
        %v453 = vld [vmem:[%s326 + $0x20] sm:$0xf]
        %v454 = vld [vmem:[%s326 + $0x24] sm:$0xf]
        %v455 = vld [vmem:[%s326 + $0x28] sm:$0xf]
        %v456 = vld [vmem:[%s326 + $0x2c] sm:$0xf]
        %v457 = vld [vmem:[%s326 + $0x30] sm:$0xf]
        %v458 = vld [vmem:[%s326 + $0x34] sm:$0xf]
        %v459 = vld [vmem:[%s326 + $0x38] sm:$0xf]
        %v460 = vld [vmem:[%s326 + $0x3c] sm:$0xf]
        %v461 = vld [vmem:[%s364] sm:$0xf]
        %v462 = vpack.c.bf16 %v426, %v423
        %v479 = vunpack.c.l.b16 %v429
        %v480 = vunpack.c.l.b16 %v430
        %v481 = vunpack.c.l.b16 %v431
        %v482 = vunpack.c.l.b16 %v432
        %v483 = vunpack.c.l.b16 %v433
        %v484 = vunpack.c.l.b16 %v434
        %v485 = vunpack.c.l.b16 %v435
        %v486 = vunpack.c.l.b16 %v436
        %v487 = vunpack.c.l.b16 %v437
        %v488 = vunpack.c.l.b16 %v438
        %v489 = vunpack.c.l.b16 %v439
        %v490 = vunpack.c.l.b16 %v440
        %v491 = vunpack.c.l.b16 %v441
        %v492 = vunpack.c.l.b16 %v442
        %v493 = vunpack.c.l.b16 %v443
        %v494 = vunpack.c.l.b16 %v444
        %v495 = vpack.c.b16 %v480, %v479
        %v496 = vpack.c.b16 %v482, %v481
        %v497 = vpack.c.b16 %v484, %v483
        %v498 = vpack.c.b16 %v486, %v485
        %v499 = vpack.c.b16 %v488, %v487
        %v500 = vpack.c.b16 %v490, %v489
        %v501 = vpack.c.b16 %v492, %v491
        %v502 = vpack.c.b16 %v494, %v493
        %511 = vmatprep.subr.bf16.mxu0 0
        %512 = vmatpush1.bf16.msra.mxu0 %v495
        %513 = vmatprep.subr.bf16.mxu0 0
        %514 = vmatpush1.bf16.msra.mxu0 %v496
        %515 = vmatprep.subr.bf16.mxu0 0
        %516 = vmatpush1.bf16.msra.mxu0 %v497
        %517 = vmatprep.subr.bf16.mxu0 0
        %518 = vmatpush1.bf16.msra.mxu0 %v498
        %519 = vmatprep.subr.bf16.mxu0 0
        %520 = vmatpush1.bf16.msra.mxu0 %v499
        %521 = vmatprep.subr.bf16.mxu0 0
        %522 = vmatpush1.bf16.msra.mxu0 %v500
        %523 = vmatprep.subr.bf16.mxu0 0
        %524 = vmatpush1.bf16.msra.mxu0 %v501
        %525 = vmatprep.subr.bf16.mxu0 0
        %526 = vmatpush1.bf16.msra.mxu0 %v502
        %527 = vmatprep.subr.bf16.mxu0 0
        %528 = vmatpush1.bf16.msra.mxu0 0
        %529 = vmatprep.subr.bf16.mxu0 0
        %530 = vmatpush1.bf16.msra.mxu0 0
        %531 = vmatprep.subr.bf16.mxu0 0
        %532 = vmatpush1.bf16.msra.mxu0 0
        %533 = vmatprep.subr.bf16.mxu0 0
        %534 = vmatpush1.bf16.msra.mxu0 0
        %535 = vmatprep.subr.bf16.mxu0 0
        %536 = vmatpush1.bf16.msra.mxu0 0
        %537 = vmatprep.subr.bf16.mxu0 0
        %538 = vmatpush1.bf16.msra.mxu0 0
        %539 = vmatprep.subr.bf16.mxu0 0
        %540 = vmatpush1.bf16.msra.mxu0 0
        %541 = vmatprep.subr.bf16.mxu0 0
        %542 = vmatpush1.bf16.msra.mxu0 0
        %543 = vmatprep.mubr.bf16.mxu0 0
        %544 = vmatmul.mubr.bf16.gmra.mrb[0].mxu0 %v462
        %v545 = vpop.f32.mrb[0].mxu0
        %v546 = vadd.f32 0.0, %v545
        %v547 = vpop.f32.mrb[0].mxu0
        %v548 = vpop.f32.mrb[0].mxu0
        %v549 = vadd.f32 0.0, %v548
        %v550 = vpop.f32.mrb[0].mxu0
        %551 = vdwg.mxu0
        %v552 = vadd.f32 %v546, %v549
        %v553 = vrot.slane %v552, 4
        %v554 = vadd.f32 %v552, %v553
        %v555 = vrot.slane %v554, 2
        %v556 = vadd.f32 %v554, %v555
        %v557 = vrot.slane %v556, 1
        %v558 = vadd.f32 %v556, %v557
        %v559 = vrcp.pop 16.0
        %v560 = vmul.f32 %v558, %v559
        %v561 = vmul.f32 %v546, %v546
        %v562 = vmul.f32 %v549, %v549
        %v563 = vadd.f32 %v561, %v562
        %v564 = vrot.slane %v563, 4
        %v565 = vadd.f32 %v563, %v564
        %v566 = vrot.slane %v565, 2
        %v567 = vadd.f32 %v565, %v566
        %v568 = vrot.slane %v567, 1
        %v569 = vadd.f32 %v567, %v568
        %v570 = vmul.f32 %v569, %v559
        %v571 = vmul.f32 %v560, %v560
        %v572 = vsub.f32 %v570, %v571
        %v573 = vmax.f32 %v572, 0.0
        %v574 = vadd.f32 %v573, 1e-05
        %v575 = vrsqrt.pop %v574
        %v576 = vmul.f32 %v461, %v575
        %v577 = vmul.f32 %v560, %v576
        %v579 = vrot.slane %v577, 7
        %v581 = vsub.f32 %v461, %v579
        %v582 = vlaneseq
        %v583 = vshrl.u32 %v582, 7
        %v584 = vsub.s32 0, %v583
        %v585 = vrot.slane %v576, %v584
        %v586 = vmul.f32 %v546, %v585
        %v587 = vmul.f32 %v549, %v585
        %v588 = vlaneseq
        %v589 = vshrl.u32 %v588, 7
        %v590 = vsub.s32 1, %v589
        %v591 = vrot.slane %v581, %v590
        %v592 = vadd.f32 %v586, %v591
        %v593 = vadd.f32 %v587, %v591
        %v594 = vmax.f32 %v592, 0.0
        %v595 = vmax.f32 %v593, 0.0
        %v596 = vpack.c.bf16 %v595, %v594
        %v613 = vunpack.c.l.b16 %v445
        %v614 = vunpack.c.l.b16 %v446
        %v615 = vunpack.c.l.b16 %v447
        %v616 = vunpack.c.l.b16 %v448
        %v617 = vunpack.c.l.b16 %v449
        %v618 = vunpack.c.l.b16 %v450
        %v619 = vunpack.c.l.b16 %v451
        %v620 = vunpack.c.l.b16 %v452
        %v621 = vunpack.c.l.b16 %v453
        %v622 = vunpack.c.l.b16 %v454
        %v623 = vunpack.c.l.b16 %v455
        %v624 = vunpack.c.l.b16 %v456
        %v625 = vunpack.c.l.b16 %v457
        %v626 = vunpack.c.l.b16 %v458
        %v627 = vunpack.c.l.b16 %v459
        %v628 = vunpack.c.l.b16 %v460
        %v629 = vpack.c.b16 %v614, %v613
        %v630 = vpack.c.b16 %v616, %v615
        %v631 = vpack.c.b16 %v618, %v617
        %v632 = vpack.c.b16 %v620, %v619
        %v633 = vpack.c.b16 %v622, %v621
        %v634 = vpack.c.b16 %v624, %v623
        %v635 = vpack.c.b16 %v626, %v625
        %v636 = vpack.c.b16 %v628, %v627
        %645 = vmatprep.subr.bf16.mxu0 0
        %646 = vmatpush1.bf16.msra.mxu0 %v629
        %647 = vmatprep.subr.bf16.mxu0 0
        %648 = vmatpush1.bf16.msra.mxu0 %v630
        %649 = vmatprep.subr.bf16.mxu0 0
        %650 = vmatpush1.bf16.msra.mxu0 %v631
        %651 = vmatprep.subr.bf16.mxu0 0
        %652 = vmatpush1.bf16.msra.mxu0 %v632
        %653 = vmatprep.subr.bf16.mxu0 0
        %654 = vmatpush1.bf16.msra.mxu0 %v633
        %655 = vmatprep.subr.bf16.mxu0 0
        %656 = vmatpush1.bf16.msra.mxu0 %v634
        %657 = vmatprep.subr.bf16.mxu0 0
        %658 = vmatpush1.bf16.msra.mxu0 %v635
        %659 = vmatprep.subr.bf16.mxu0 0
        %660 = vmatpush1.bf16.msra.mxu0 %v636
        %661 = vmatprep.subr.bf16.mxu0 0
        %662 = vmatpush1.bf16.msra.mxu0 0
        %663 = vmatprep.subr.bf16.mxu0 0
        %664 = vmatpush1.bf16.msra.mxu0 0
        %665 = vmatprep.subr.bf16.mxu0 0
        %666 = vmatpush1.bf16.msra.mxu0 0
        %667 = vmatprep.subr.bf16.mxu0 0
        %668 = vmatpush1.bf16.msra.mxu0 0
        %669 = vmatprep.subr.bf16.mxu0 0
        %670 = vmatpush1.bf16.msra.mxu0 0
        %671 = vmatprep.subr.bf16.mxu0 0
        %672 = vmatpush1.bf16.msra.mxu0 0
        %673 = vmatprep.subr.bf16.mxu0 0
        %674 = vmatpush1.bf16.msra.mxu0 0
        %675 = vmatprep.subr.bf16.mxu0 0
        %676 = vmatpush1.bf16.msra.mxu0 0
        %677 = vmatprep.mubr.bf16.mxu0 0
        %678 = vmatmul.mubr.bf16.gmra.mrb[0].mxu0 %v596
        %v679 = vpop.f32.mrb[0].mxu0
        %v680 = vadd.f32 0.0, %v679
        %v681 = vpop.f32.mrb[0].mxu0
        %v682 = vpop.f32.mrb[0].mxu0
        %v683 = vadd.f32 0.0, %v682
        %v684 = vpop.f32.mrb[0].mxu0
        %685 = vdwg.mxu0
        %v686 = vadd.f32 %v680, %v683
        %v687 = vrot.slane %v686, 4
        %v688 = vadd.f32 %v686, %v687
        %v689 = vrot.slane %v688, 2
        %v690 = vadd.f32 %v688, %v689
        %v691 = vrot.slane %v690, 1
        %v692 = vadd.f32 %v690, %v691
        %v693 = vmul.f32 %v692, %v559
        %v694 = vmul.f32 %v680, %v680
        %v695 = vmul.f32 %v683, %v683
        %v696 = vadd.f32 %v694, %v695
        %v697 = vrot.slane %v696, 4
        %v698 = vadd.f32 %v696, %v697
        %v699 = vrot.slane %v698, 2
        %v700 = vadd.f32 %v698, %v699
        %v701 = vrot.slane %v700, 1
        %v702 = vadd.f32 %v700, %v701
        %v703 = vmul.f32 %v702, %v559
        %v704 = vmul.f32 %v693, %v693
        %v705 = vsub.f32 %v703, %v704
        %v706 = vmax.f32 %v705, 0.0
        %v707 = vadd.f32 %v706, 1e-05
        %v708 = vrsqrt.pop %v707
        %v709 = vmul.f32 %v461, %v708
        %v710 = vmul.f32 %v693, %v709
        %v712 = vrot.slane %v710, 7
        %v714 = vsub.f32 %v461, %v712
        %v715 = vlaneseq
        %v716 = vshrl.u32 %v715, 7
        %v717 = vsub.s32 2, %v716
        %v718 = vrot.slane %v709, %v717
        %v719 = vmul.f32 %v680, %v718
        %v720 = vmul.f32 %v683, %v718
        %v721 = vlaneseq
        %v722 = vshrl.u32 %v721, 7
        %v723 = vsub.s32 3, %v722
        %v724 = vrot.slane %v714, %v723
        %v725 = vadd.f32 %v719, %v724
        %v726 = vadd.f32 %v720, %v724
        %v727 = vmax.f32 %v725, 0.0
        %v728 = vmax.f32 %v726, 0.0
        %729 = vst [vmem:[#allocation9] sm:$0xff] %v727
        %730 = vst [vmem:[#allocation9 + $0x8] sm:$0xff] %v728
        %p731 = scmp.eq.s32.totalorder %s23, 1
        // Predicated region
        $region65: #{tpu_custom_call.1} parent=43 // pred_check
          %p732 = pneg %p731
        $region66: #{tpu_custom_call.1} parent=43 // pred_check_branch
          %734 = sbr.rel (%p732) target = $region68
        $region67: #{tpu_custom_call.1} parent=43 // pred_region
          %v735 = vld [vmem:[%s2] sm:$0x3]
          %v737 = vsel %vm384, %v735, 0
          %739 = vmatprep.subr.mxu0 0.0
          %740 = vmatpush1.msra.mxu0 %v727
          %741 = vmatprep.subr.mxu0 0.0
          %742 = vmatpush1.msra.mxu0 %v728
          %743 = vmatprep.subr.mxu0 0.0
          %744 = vmatpush1.msra.mxu0 0.0
          %745 = vmatprep.subr.mxu0 0.0
          %746 = vmatpush1.msra.mxu0 0.0
          %747 = vmatprep.subr.mxu0 0.0
          %748 = vmatpush1.msra.mxu0 0.0
          %749 = vmatprep.subr.mxu0 0.0
          %750 = vmatpush1.msra.mxu0 0.0
          %751 = vmatprep.subr.mxu0 0.0
          %752 = vmatpush1.msra.mxu0 0.0
          %753 = vmatprep.subr.mxu0 0.0
          %754 = vmatpush1.msra.mxu0 0.0
          %755 = vmatprep.subr.mxu0 0.0
          %756 = vmatpush1.msra.mxu0 0.0
          %757 = vmatprep.subr.mxu0 0.0
          %758 = vmatpush1.msra.mxu0 0.0
          %759 = vmatprep.subr.mxu0 0.0
          %760 = vmatpush1.msra.mxu0 0.0
          %761 = vmatprep.subr.mxu0 0.0
          %762 = vmatpush1.msra.mxu0 0.0
          %763 = vmatprep.subr.mxu0 0.0
          %764 = vmatpush1.msra.mxu0 0.0
          %765 = vmatprep.subr.mxu0 0.0
          %766 = vmatpush1.msra.mxu0 0.0
          %767 = vmatprep.subr.mxu0 0.0
          %768 = vmatpush1.msra.mxu0 0.0
          %769 = vmatprep.subr.mxu0 0.0
          %770 = vmatpush1.msra.mxu0 0.0
          %771 = vmatprep.subr.mxu0 0.0
          %772 = vmatpush1.msra.mxu0 0.0
          %773 = vmatprep.subr.mxu0 0.0
          %774 = vmatpush1.msra.mxu0 0.0
          %775 = vmatprep.subr.mxu0 0.0
          %776 = vmatpush1.msra.mxu0 0.0
          %777 = vmatprep.subr.mxu0 0.0
          %778 = vmatpush1.msra.mxu0 0.0
          %779 = vmatprep.subr.mxu0 0.0
          %780 = vmatpush1.msra.mxu0 0.0
          %781 = vmatprep.subr.mxu0 0.0
          %782 = vmatpush1.msra.mxu0 0.0
          %783 = vmatprep.subr.mxu0 0.0
          %784 = vmatpush1.msra.mxu0 0.0
          %785 = vmatprep.subr.mxu0 0.0
          %786 = vmatpush1.msra.mxu0 0.0
          %787 = vmatprep.subr.mxu0 0.0
          %788 = vmatpush1.msra.mxu0 0.0
          %789 = vmatprep.subr.mxu0 0.0
          %790 = vmatpush1.msra.mxu0 0.0
          %791 = vmatprep.subr.mxu0 0.0
          %792 = vmatpush1.msra.mxu0 0.0
          %793 = vmatprep.subr.mxu0 0.0
          %794 = vmatpush1.msra.mxu0 0.0
          %795 = vmatprep.subr.mxu0 0.0
          %796 = vmatpush1.msra.mxu0 0.0
          %797 = vmatprep.subr.mxu0 0.0
          %798 = vmatpush1.msra.mxu0 0.0
          %799 = vmatprep.subr.mxu0 0.0
          %800 = vmatpush1.msra.mxu0 0.0
          %801 = vmatprep.subr.mxu0 0.0
          %802 = vmatpush1.msra.mxu0 0.0
          %803 = vmatprep.mubr.f32.mxu0 0.0
          %804 = vmatmul.mubr.f32.gmra.mrb[0].mxu0 %v737
          %v805 = vpop.f32.mrb[0].mxu0
          %v806 = vadd.f32 0.0, %v805
          %v807 = vpop.f32.mrb[0].mxu0
          %808 = vdwg.mxu0
          %809 = vst [vmem:[#allocation10] sm:$0x3] %v806
        $region68: #{tpu_custom_call.1} parent=43 // pred_fallthru
          _
        // Predicated region
        $region69: #{tpu_custom_call.1} parent=43 // pred_check
          %p810 = pneg %p177
        $region70: #{tpu_custom_call.1} parent=43 // pred_check_branch
          %812 = sbr.rel (%p810) target = $region72
        $region71: #{tpu_custom_call.1} parent=43 // pred_region
          %s814 = ssub.s32 256, 256
          %815 = vsyncadd [#allocation4], %s814
          %s816 = sshll.u32 [#allocation9], 4
          %s817 = int_to_ptr.vmem [resolvable:$true] %s816
          %822 = dma.vmem_to_hbm [thread:$0]  %s817, 256, %s6, [#allocation4], 128, 128, 8
        $region72: #{tpu_custom_call.1} parent=43 // pred_fallthru
          _
        // Predicated region
        $region73: #{tpu_custom_call.1} parent=43 // pred_check
          %p823 = pneg %p198
        $region74: #{tpu_custom_call.1} parent=43 // pred_check_branch
          %825 = sbr.rel (%p823) target = $region76
        $region75: #{tpu_custom_call.1} parent=43 // pred_region
          %s827 = ssub.s32 32, 32
          %828 = vsyncadd [#allocation11], %s827
          %s830 = sshll.u32 [#allocation10], 4
          %s831 = int_to_ptr.vmem [resolvable:$true] %s830
          %833 = dma.vmem_to_hbm [thread:$0]  %s831, 32, %s7, [#allocation11]
        $region76: #{tpu_custom_call.1} parent=43 // pred_fallthru
          _
        // Predicated region
        $region77: #{tpu_custom_call.1} parent=43 // pred_check
          %p834 = pneg %p177
        $region78: #{tpu_custom_call.1} parent=43 // pred_check_branch
          %836 = sbr.rel (%p834) target = $region80
        $region79: #{tpu_custom_call.1} parent=43 // pred_region
          %837 = dma.done [#allocation4], 256
        $region80: #{tpu_custom_call.1} parent=43 // pred_fallthru
          _
        // Predicated region
        $region81: #{tpu_custom_call.1} parent=43 // pred_check
          %p838 = pneg %p198
        $region82: #{tpu_custom_call.1} parent=43 // pred_check_branch
          %840 = sbr.rel (%p838) target = $region84
        $region83: #{tpu_custom_call.1} parent=43 // pred_region
          %841 = dma.done [#allocation11], 32
        $region84: #{tpu_custom_call.1} parent=43 // pred_fallthru
          _
      $region44: #{tpu_custom_call.1} parent=5 // pred_fallthru
        _
      %p842 = scmp.le.s32.totalorder 2, %s18
      // Predicated region
      $region85: #{tpu_custom_call.1} parent=5 // pred_check
        %p843 = pneg %p842
      $region86: #{tpu_custom_call.1} parent=5 // pred_check_branch
        %845 = sbr.rel (%p843) target = $region88
      $region87: #{tpu_custom_call.1} parent=5 // pred_region
        %s846 = ssub.s32 %s18, 2
      $region88: #{tpu_custom_call.1} parent=5 // pred_fallthru
        _
    $region6: #{tpu_custom_call.1} parent=1 // loop_footer
      %s22 = sadd.s32 1, %s18
    $region7: #{tpu_custom_call.1} parent=1 // loop_footer_branch
      %17 = sbr.rel target = $region3
    $region8: #{tpu_custom_call.1} parent=1 // loop_exit
      _
    %847 = vsyncpa [#allocation3], 1
    %s848 = scalar_lea.sflag [#allocation3], 1
    %849 = vsyncpa %s848, 1
    %850 = vsyncpa [#allocation6], 1
    %851 = vsyncpa [#allocation4], 1
    %s852 = scalar_lea.sflag [#allocation4], 1
    %853 = vsyncpa %s852, 1
    %854 = vsyncpa [#allocation11], 1

</llo_original>
